<compile_context>
chip_gen: v7x
topology: tpu7x:2x2x1
jax: 0.10.0
libtpu: 0.0.40
codegen_flags: <defaults>
</compile_context>

<pallas_src>
import functools
import jax
import jax.numpy as jnp
from jax.experimental import pallas as pl
from jax.experimental.pallas import tpu as pltpu

# Atom index conventions (diffab-style): N, CA, C, O, ...
ATOM_N, ATOM_CA, ATOM_C = 0, 1, 2
NUM_PE_FUNCS = 6            # PositionalEncoding num_funcs
LN_EPS = 1e-5


def _round_up(a, b):
    return ((a + b - 1) // b) * b


def _tpu_generation():
    try:
        kind = jax.devices()[0].device_kind.lower()
    except Exception:
        return 'other'
    if 'v5 lite' in kind or 'v5e' in kind or 'v5lite' in kind:
        return 'v5e'
    if 'v6' in kind or 'trillium' in kind:
        return 'v6e'
    if 'v7' in kind:
        return 'v7x'
    return 'other'


# ----------------------------------------------------------------------------
# Plain-JAX geometry helpers (glue)
# ----------------------------------------------------------------------------
def _normalize(v, eps=1e-6):
    return v / (jnp.linalg.norm(v, axis=-1, keepdims=True) + eps)


def construct_3d_basis(center, p1, p2):
    """Orthonormal frame with columns (e1, e2, e3)."""
    v1 = p1 - center
    e1 = _normalize(v1)
    v2 = p2 - center
    u2 = v2 - jnp.sum(e1 * v2, axis=-1, keepdims=True) * e1
    e2 = _normalize(u2)
    e3 = jnp.cross(e1, e2)
    return jnp.stack([e1, e2, e3], axis=-1)          # (N, L, 3, 3)


def mask_frames_identity(R, mask_res):
    eye = jnp.eye(3, dtype=R.dtype)
    return jnp.where(mask_res[..., None, None], R, eye)


def mask_coordinates_zero(t, mask_res):
    return t * mask_res[..., None].astype(t.dtype)


def global_to_local(R, t, q):
    """p = R^T (q - t);  q: (N, L, K, 3)."""
    p = q - t[:, :, None, :]
    return jnp.einsum('nlji,nlkj->nlki', R, p)


def pairwise_distances(x, y, eps=1e-12):
    """x: (N, L, 3), y: (N, M, 3) -> (N, L, M)."""
    diff = x[:, :, None, :] - y[:, None, :, :]
    return jnp.sqrt(jnp.sum(diff * diff, axis=-1) + eps)


def knn_gather(idx, value):
    """idx: (N, L, K) int, value: (N, M, C) -> (N, L, K, C)."""
    return jax.vmap(lambda v, i: v[i])(value, idx)


def positional_encoding(x, num_funcs=NUM_PE_FUNCS):
    """Sinusoidal encoding: in_dim -> in_dim * (2*num_funcs + 1)."""
    freq_bands = (2.0 ** jnp.linspace(0.0, num_funcs - 1, num_funcs)).astype(x.dtype)
    xe = x[..., None]                                              # (..., d, 1)
    code = jnp.concatenate(
        [xe, jnp.sin(xe * freq_bands), jnp.cos(xe * freq_bands)], axis=-1)
    return code.reshape(*x.shape[:-1], -1)


def pe_out_dim(in_dim, num_funcs=NUM_PE_FUNCS):
    return in_dim * (2 * num_funcs + 1)


# ----------------------------------------------------------------------------
# Pallas kernel: fused point-MLP + pooling + residue-MLP + residual + LayerNorm
# Processes R residues (R*K_pad neighbour rows) per grid step.  All feature
# dims are pre-padded to multiples of 128; k_valid/f_valid are the un-padded
# extents (static Python ints).
# ----------------------------------------------------------------------------
def point_block_kernel(x_ref, rf_ref,
                       w1_ref, b1_ref, w2_ref, b2_ref, w3_ref, b3_ref,
                       u1m_ref, u1x_ref, c1_ref, u2_ref, c2_ref, u3_ref,
                       c3_ref, g_ref, bta_ref, out_ref, *, k_valid, f_valid):
    R, Kp, Din = x_ref.shape
    Fp = out_ref.shape[-1]

    # (R, Kp, Din) -> (R*Kp, Din): leading-dim merge only; free because Kp is
    # a multiple of the bf16 sublane pack (16).
    x = x_ref[...].reshape(R * Kp, Din)                            # bf16

    # point_mlp: Din -> H -> H -> F (padded dims), ReLU between, f32 accumulate.
    h = jnp.dot(x, w1_ref[...], preferred_element_type=jnp.float32) + b1_ref[...]
    h = jnp.maximum(h, 0.0).astype(jnp.bfloat16)
    h = jnp.dot(h, w2_ref[...], preferred_element_type=jnp.float32) + b2_ref[...]
    h = jnp.maximum(h, 0.0).astype(jnp.bfloat16)
    hj = jnp.dot(h, w3_ref[...], preferred_element_type=jnp.float32) + b3_ref[...]
    hj = hj.reshape(R, Kp, Fp)                                     # f32

    # pooling over the K neighbours (exclude padded dummy neighbour rows)
    if k_valid == Kp:
        h_mean = jnp.mean(hj, axis=1)                              # (R, Fp)
        h_max = jnp.max(hj, axis=1)
    else:
        kmask = jax.lax.broadcasted_iota(jnp.int32, (1, Kp, 1), 1) < k_valid
        h_mean = jnp.sum(jnp.where(kmask, hj, 0.0), axis=1) * (1.0 / k_valid)
        h_max = jnp.max(jnp.where(kmask, hj, -jnp.inf), axis=1)

    # residue_mlp: 2F -> F -> F -> F.  U1 pre-split into (mean, max) halves so
    # no lane-axis concat is needed before the first matmul.
    r = (jnp.dot(h_mean.astype(jnp.bfloat16), u1m_ref[...],
                 preferred_element_type=jnp.float32)
         + jnp.dot(h_max.astype(jnp.bfloat16), u1x_ref[...],
                   preferred_element_type=jnp.float32)
         + c1_ref[...])
    r = jnp.maximum(r, 0.0).astype(jnp.bfloat16)
    r = jnp.dot(r, u2_ref[...], preferred_element_type=jnp.float32) + c2_ref[...]
    r = jnp.maximum(r, 0.0).astype(jnp.bfloat16)
    r = jnp.dot(r, u3_ref[...], preferred_element_type=jnp.float32) + c3_ref[...]

    # residual + LayerNorm over the f_valid real features (padded lanes of y
    # are exactly zero by construction of the zero-padded weights/biases).
    y = rf_ref[...] + r                                            # (R, Fp) f32
    if f_valid == Fp:
        mu = jnp.mean(y, axis=-1, keepdims=True)
        var = jnp.mean((y - mu) ** 2, axis=-1, keepdims=True)
    else:
        inv_f = 1.0 / f_valid
        mu = jnp.sum(y, axis=-1, keepdims=True) * inv_f            # pads are 0
        fmask = jax.lax.broadcasted_iota(jnp.int32, (1, Fp), 1) < f_valid
        var = jnp.sum(jnp.where(fmask, (y - mu) ** 2, 0.0),
                      axis=-1, keepdims=True) * inv_f
    out_ref[...] = (y - mu) * jax.lax.rsqrt(var + LN_EPS) * g_ref[...] + bta_ref[...]


def _pad2(a, rows, cols):
    pr, pc = rows - a.shape[0], cols - a.shape[1]
    if pr or pc:
        a = jnp.pad(a, ((0, pr), (0, pc)))
    return a


def fused_point_block(h_j, res_feat, mask_res, p):
    """h_j: (N, L, K, Din_pad) bf16, res_feat: (N, L, F), mask_res: (N, L)."""
    N, L, K, Din_pad = h_j.shape
    F = res_feat.shape[-1]
    NL = N * L
    H = 2 * F
    F_pad = _round_up(F, 128)
    H_pad = _round_up(H, 128)
    K_pad = _round_up(K, 16)        # bf16 sublane pack -> free in-kernel reshapes
    Din = p['W1'].shape[0]

    gen = _tpu_generation()
    # R residues per grid step; multiple of 8.  256 fills the 256-wide MXU on
    # v6e/v7x; 128 on v5e (128-wide MXU, 16 MiB default scoped VMEM).
    r_target = 256 if gen in ('v6e', 'v7x') else 128
    R = min(r_target, _round_up(NL, 8))
    NL_pad = _round_up(NL, R)
    if gen == 'v7x':
        # keep grid length >= 2 so both TensorCores get work via "parallel".
        while NL_pad // R < 2 and R > 8:
            R = _round_up(max(R // 2, 8), 8)
            NL_pad = _round_up(NL, R)
    num_steps = NL_pad // R

    x = h_j.reshape(NL, K, Din_pad)                                # bf16
    rf = res_feat.reshape(NL, F).astype(jnp.float32)
    if (NL_pad - NL) or (K_pad - K):
        x = jnp.pad(x, ((0, NL_pad - NL), (0, K_pad - K), (0, 0)))
    if (NL_pad - NL) or (F_pad - F):
        rf = jnp.pad(rf, ((0, NL_pad - NL), (0, F_pad - F)))

    bf = lambda a: a.astype(jnp.bfloat16)
    U1 = p['U1']
    weights = [
        bf(_pad2(p['W1'], Din_pad, H_pad)), _pad2(p['b1'], 1, H_pad),
        bf(_pad2(p['W2'], H_pad, H_pad)),   _pad2(p['b2'], 1, H_pad),
        bf(_pad2(p['W3'], H_pad, F_pad)),   _pad2(p['b3'], 1, F_pad),
        bf(_pad2(U1[:F], F_pad, F_pad)),    bf(_pad2(U1[F:], F_pad, F_pad)),
        _pad2(p['c1'], 1, F_pad),
        bf(_pad2(p['U2'], F_pad, F_pad)),   _pad2(p['c2'], 1, F_pad),
        bf(_pad2(p['U3'], F_pad, F_pad)),   _pad2(p['c3'], 1, F_pad),
        _pad2(p['gamma'], 1, F_pad),        _pad2(p['beta'], 1, F_pad),
    ]

    # Pipeline tuning: deeper buffering on the activation stream for v6e/v7x
    # (only when the grid is long enough to benefit); on v7x single-buffer the
    # constant-index weights to save VMEM under the 64 MiB ceiling.
    use_deep_pipeline = gen in ('v6e', 'v7x') and num_steps >= 3
    if use_deep_pipeline:
        x_spec = pl.BlockSpec((R, K_pad, Din_pad), lambda i: (i, 0, 0),
                              pipeline_mode=pl.Buffered(3))
    else:
        x_spec = pl.BlockSpec((R, K_pad, Din_pad), lambda i: (i, 0, 0))

    def full_spec(a):
        # Full-extent block, constant index map: parameters stay resident in
        # VMEM across grid steps (no per-step re-DMA).
        if gen == 'v7x':
            return pl.BlockSpec(a.shape, lambda i: (0,) * a.ndim,
                                pipeline_mode=pl.Buffered(1))
        return pl.BlockSpec(a.shape, lambda i: (0,) * a.ndim)

    # VMEM budget (explicit limit only where we enlarge the working set).
    x_block = R * K_pad * Din_pad * 2
    io_block = R * F_pad * 4
    w_bytes = sum(int(w.size) * w.dtype.itemsize for w in weights)
    w_bufs = 1 if gen == 'v7x' else 2
    interm = R * K_pad * max(H_pad, F_pad) * 4 * 2
    vmem_est = (x_block * (3 if use_deep_pipeline else 2)
                + io_block * 4 + w_bytes * w_bufs + interm)
    cp = dict(dimension_semantics=("parallel",))
    if gen in ('v6e', 'v7x'):
        cap = (100 << 20) if gen == 'v6e' else (48 << 20)
        cp['vmem_limit_bytes'] = int(min(cap, max(32 << 20, vmem_est * 3 // 2)))

    flops = 2 * NL_pad * (K_pad * (Din_pad * H_pad + H_pad * H_pad + H_pad * F_pad)
                          + (2 * F_pad * F_pad + F_pad * F_pad + F_pad * F_pad))
    bytes_accessed = (int(x.size) * 2 + int(rf.size) * 4
                      + NL_pad * F_pad * 4 + w_bytes)

    kernel = functools.partial(point_block_kernel, k_valid=K, f_valid=F)
    out = pl.pallas_call(
        kernel,
        out_shape=jax.ShapeDtypeStruct((NL_pad, F_pad), jnp.float32),
        grid=(num_steps,),
        in_specs=[x_spec, pl.BlockSpec((R, F_pad), lambda i: (i, 0))]
                 + [full_spec(w) for w in weights],
        out_specs=pl.BlockSpec((R, F_pad), lambda i: (i, 0)),
        compiler_params=pltpu.CompilerParams(**cp),
        cost_estimate=pl.CostEstimate(flops=int(flops), transcendentals=int(NL_pad),
                                      bytes_accessed=int(bytes_accessed)),
    )(x, rf, *weights)

    out = out[:NL, :F].reshape(N, L, F)
    return out * mask_res[..., None].astype(out.dtype)


# ----------------------------------------------------------------------------
# PointEncodingBlock / PointEncoder forward
# ----------------------------------------------------------------------------
def precompute_geometry(pos14, aa, mask_atom, n_knn_cfg):
    """Geometry that is constant across all blocks (pos14/aa/mask only)."""
    N, L = aa.shape
    mask_res = mask_atom[:, :, ATOM_CA]                            # (N, L)
    mask_flat = mask_atom.reshape(N, L * 14)                       # (N, L*14)

    Rm = construct_3d_basis(pos14[:, :, ATOM_CA], pos14[:, :, ATOM_C],
                            pos14[:, :, ATOM_N])
    Rm = mask_frames_identity(Rm, mask_res)
    t = mask_coordinates_zero(pos14[:, :, ATOM_CA], mask_res)

    pos_ca = pos14[:, :, ATOM_CA, :]                               # (N, L, 3)
    pos_all = pos14.reshape(N, L * 14, 3)                          # (N, L*14, 3)
    d = pairwise_distances(pos_ca, pos_all)                        # (N, L, L*14)
    d = jnp.where(mask_flat[:, None, :], d, jnp.inf)

    # TODO(synk): n_knn is data-dependent (host-side .item() in the PyTorch
    # reference); this concretizes the mask and is not jittable over it.
    n_knn = min(int(jnp.min(jnp.sum(mask_flat.astype(jnp.int32), axis=-1))),
                n_knn_cfg)
    # TODO(synk): top-k has no clean Pallas equivalent; done with lax.top_k.
    _, knn_idx = jax.lax.top_k(-d, n_knn)                          # (N, L, K)

    pos_j = knn_gather(knn_idx, pos_all)                           # (N, L, K, 3)
    pos_ij = global_to_local(Rm, t, pos_j)                         # (N, L, K, 3)
    dist_ij = jnp.sqrt(jnp.sum(pos_ij * pos_ij, axis=-1, keepdims=True) + 1e-8)
    spatial_ij = positional_encoding(
        jnp.concatenate([pos_ij, dist_ij], axis=-1)).astype(jnp.bfloat16)

    atom_type = aa[:, :, None] * 14 + jnp.arange(14, dtype=aa.dtype)[None, None, :]
    return dict(mask_res=mask_res, knn_idx=knn_idx,
                spatial_ij=spatial_ij, atom_type=atom_type)


def point_encoding_block(params, geom, res_feat):
    N, L, F = res_feat.shape
    spatial_ij = geom['spatial_ij']                                # (N,L,K,52) bf16
    K = spatial_ij.shape[2]
    Din = spatial_ij.shape[-1] + 2 * F
    Din_pad = _round_up(Din, 128)

    # per-atom features built directly in bf16 (halves gather + h_j traffic).
    # cat along dim=2 then reshape — exactly mirrors the PyTorch code.
    emb = params['atom_embed'].astype(jnp.bfloat16)[geom['atom_type']]   # (N,L,14,F)
    rf_rep = jnp.repeat(res_feat.astype(jnp.bfloat16)[:, :, None, :], 14, axis=2)
    atom_feat = jnp.concatenate([rf_rep, emb], axis=2).reshape(N, L * 14, 2 * F)

    feat_j = knn_gather(geom['knn_idx'], atom_feat)                # (N,L,K,2F) bf16
    parts = [spatial_ij, feat_j]
    if Din_pad > Din:
        # fold the lane padding into the producing concat (single materialisation)
        parts.append(jnp.zeros((N, L, K, Din_pad - Din), jnp.bfloat16))
    h_j = jnp.concatenate(parts, axis=-1)                          # (N,L,K,Din_pad)

    return fused_point_block(h_j, res_feat, geom['mask_res'], params)


def point_encoder(all_params, pos14, res_feat, aa, mask_atom, n_knn):
    geom = precompute_geometry(pos14, aa, mask_atom, n_knn)
    h = res_feat
    for params in all_params:   # torch.utils.checkpoint is forward-identity
        h = point_encoding_block(params, geom, h)
    return h


# ----------------------------------------------------------------------------
# Deterministic parameter init (synthetic; mirrors __init__ shapes)
# ----------------------------------------------------------------------------
def init_block_params(key, feat_dim):
    F = feat_dim
    din = pe_out_dim(3 + 1) + 2 * F
    ks = jax.random.split(key, 10)
    s = 0.05
    return {
        'atom_embed': s * jax.random.normal(ks[0], (21 * 14, F), jnp.float32),
        'W1': s * jax.random.normal(ks[1], (din, 2 * F), jnp.float32),
        'b1': jnp.zeros((1, 2 * F), jnp.float32),
        'W2': s * jax.random.normal(ks[2], (2 * F, 2 * F), jnp.float32),
        'b2': jnp.zeros((1, 2 * F), jnp.float32),
        'W3': s * jax.random.normal(ks[3], (2 * F, F), jnp.float32),
        'b3': jnp.zeros((1, F), jnp.float32),
        'U1': s * jax.random.normal(ks[4], (2 * F, F), jnp.float32),
        'c1': jnp.zeros((1, F), jnp.float32),
        'U2': s * jax.random.normal(ks[5], (F, F), jnp.float32),
        'c2': jnp.zeros((1, F), jnp.float32),
        'U3': s * jax.random.normal(ks[6], (F, F), jnp.float32),
        'c3': jnp.zeros((1, F), jnp.float32),
        'gamma': jnp.ones((1, F), jnp.float32),
        'beta': jnp.zeros((1, F), jnp.float32),
    }


if __name__ == "__main__":
    N, L, F = 2, 8, 32
    n_knn, num_layers = 16, 2

    key = jax.random.PRNGKey(0)
    k_pos, k_feat, k_aa, k_mask, k_par = jax.random.split(key, 5)

    pos14 = 3.0 * jax.random.normal(k_pos, (N, L, 14, 3), jnp.float32)
    res_feat = jax.random.normal(k_feat, (N, L, F), jnp.float32)
    aa = jax.random.randint(k_aa, (N, L), 0, 21, jnp.int32)
    mask_atom = jax.random.uniform(k_mask, (N, L, 14)) > 0.1
    mask_atom = mask_atom.at[:, :, ATOM_CA].set(True)

    layer_keys = jax.random.split(k_par, num_layers)
    all_params = [init_block_params(k, F) for k in layer_keys]

    out = point_encoder(all_params, pos14, res_feat, aa, mask_atom, n_knn)
    out = jax.block_until_ready(out)
    assert out.shape == (N, L, F)
    assert bool(jnp.all(jnp.isfinite(out)))
    print("KERNEL_OK")
</pallas_src>

<mosaic_0001>
module attributes {stable_mosaic.version = 11 : i64} {
  func.func @point_block_kernel(%arg0: i32, %arg1: memref<16x16x128xbf16, #tpu.memory_space<vmem>>, %arg2: memref<16x128xf32, #tpu.memory_space<vmem>>, %arg3: memref<128x128xbf16, #tpu.memory_space<vmem>>, %arg4: memref<1x128xf32, #tpu.memory_space<vmem>>, %arg5: memref<128x128xbf16, #tpu.memory_space<vmem>>, %arg6: memref<1x128xf32, #tpu.memory_space<vmem>>, %arg7: memref<128x128xbf16, #tpu.memory_space<vmem>>, %arg8: memref<1x128xf32, #tpu.memory_space<vmem>>, %arg9: memref<128x128xbf16, #tpu.memory_space<vmem>>, %arg10: memref<128x128xbf16, #tpu.memory_space<vmem>>, %arg11: memref<1x128xf32, #tpu.memory_space<vmem>>, %arg12: memref<128x128xbf16, #tpu.memory_space<vmem>>, %arg13: memref<1x128xf32, #tpu.memory_space<vmem>>, %arg14: memref<128x128xbf16, #tpu.memory_space<vmem>>, %arg15: memref<1x128xf32, #tpu.memory_space<vmem>>, %arg16: memref<1x128xf32, #tpu.memory_space<vmem>>, %arg17: memref<1x128xf32, #tpu.memory_space<vmem>>, %arg18: memref<16x128xf32, #tpu.memory_space<vmem>>) attributes {dimension_semantics = [#tpu.dimension_semantics<parallel>], iteration_bounds = array<i64: 1>, scalar_prefetch = 0 : i64, scratch_operands = 0 : i64, tpu.core_type = #tpu.core_type<tc>, window_params = [{transform_indices = @transform_0, window_bounds = array<i64: 16, 16, 128>}, {transform_indices = @transform_1, window_bounds = array<i64: 16, 128>}, {pipeline_mode = #tpu.pipeline_mode<synchronous>, transform_indices = @transform_2, window_bounds = array<i64: 128, 128>}, {pipeline_mode = #tpu.pipeline_mode<synchronous>, transform_indices = @transform_3, window_bounds = array<i64: 1, 128>}, {pipeline_mode = #tpu.pipeline_mode<synchronous>, transform_indices = @transform_4, window_bounds = array<i64: 128, 128>}, {pipeline_mode = #tpu.pipeline_mode<synchronous>, transform_indices = @transform_5, window_bounds = array<i64: 1, 128>}, {pipeline_mode = #tpu.pipeline_mode<synchronous>, transform_indices = @transform_6, window_bounds = array<i64: 128, 128>}, {pipeline_mode = #tpu.pipeline_mode<synchronous>, transform_indices = @transform_7, window_bounds = array<i64: 1, 128>}, {pipeline_mode = #tpu.pipeline_mode<synchronous>, transform_indices = @transform_8, window_bounds = array<i64: 128, 128>}, {pipeline_mode = #tpu.pipeline_mode<synchronous>, transform_indices = @transform_9, window_bounds = array<i64: 128, 128>}, {pipeline_mode = #tpu.pipeline_mode<synchronous>, transform_indices = @transform_10, window_bounds = array<i64: 1, 128>}, {pipeline_mode = #tpu.pipeline_mode<synchronous>, transform_indices = @transform_11, window_bounds = array<i64: 128, 128>}, {pipeline_mode = #tpu.pipeline_mode<synchronous>, transform_indices = @transform_12, window_bounds = array<i64: 1, 128>}, {pipeline_mode = #tpu.pipeline_mode<synchronous>, transform_indices = @transform_13, window_bounds = array<i64: 128, 128>}, {pipeline_mode = #tpu.pipeline_mode<synchronous>, transform_indices = @transform_14, window_bounds = array<i64: 1, 128>}, {pipeline_mode = #tpu.pipeline_mode<synchronous>, transform_indices = @transform_15, window_bounds = array<i64: 1, 128>}, {pipeline_mode = #tpu.pipeline_mode<synchronous>, transform_indices = @transform_16, window_bounds = array<i64: 1, 128>}, {transform_indices = @transform_17, window_bounds = array<i64: 16, 128>}]} {
    %c0 = arith.constant 0 : index
    %c0_0 = arith.constant 0 : index
    %c0_1 = arith.constant 0 : index
    %0 = vector.load %arg1[%c0, %c0_0, %c0_1] : memref<16x16x128xbf16, #tpu.memory_space<vmem>>, vector<16x16x128xbf16>
    %1 = vector.shape_cast %0 : vector<16x16x128xbf16> to vector<256x128xbf16>
    %c0_2 = arith.constant 0 : index
    %c0_3 = arith.constant 0 : index
    %2 = vector.load %arg3[%c0_2, %c0_3] : memref<128x128xbf16, #tpu.memory_space<vmem>>, vector<128x128xbf16>
    %cst = arith.constant dense<0.000000e+00> : vector<256x128xf32>
    %3 = tpu.matmul %1, %2, %cst {dimension_numbers = #tpu.dot_dimension_numbers<[1], [0], [0], [1], [0, 0, 1, 1], [], []>} : vector<256x128xbf16>, vector<128x128xbf16>, vector<256x128xf32> -> vector<256x128xf32>
    %c0_4 = arith.constant 0 : index
    %c0_5 = arith.constant 0 : index
    %4 = vector.load %arg4[%c0_4, %c0_5] : memref<1x128xf32, #tpu.memory_space<vmem>>, vector<1x128xf32>
    %5 = vector.broadcast %4 : vector<1x128xf32> to vector<256x128xf32>
    %6 = arith.addf %3, %5 : vector<256x128xf32>
    %cst_6 = arith.constant 0.000000e+00 : f32
    %7 = vector.broadcast %cst_6 : f32 to vector<256x128xf32>
    %8 = arith.maximumf %6, %7 : vector<256x128xf32>
    %9 = arith.truncf %8 : vector<256x128xf32> to vector<256x128xbf16>
    %c0_7 = arith.constant 0 : index
    %c0_8 = arith.constant 0 : index
    %10 = vector.load %arg5[%c0_7, %c0_8] : memref<128x128xbf16, #tpu.memory_space<vmem>>, vector<128x128xbf16>
    %cst_9 = arith.constant dense<0.000000e+00> : vector<256x128xf32>
    %11 = tpu.matmul %9, %10, %cst_9 {dimension_numbers = #tpu.dot_dimension_numbers<[1], [0], [0], [1], [0, 0, 1, 1], [], []>} : vector<256x128xbf16>, vector<128x128xbf16>, vector<256x128xf32> -> vector<256x128xf32>
    %c0_10 = arith.constant 0 : index
    %c0_11 = arith.constant 0 : index
    %12 = vector.load %arg6[%c0_10, %c0_11] : memref<1x128xf32, #tpu.memory_space<vmem>>, vector<1x128xf32>
    %13 = vector.broadcast %12 : vector<1x128xf32> to vector<256x128xf32>
    %14 = arith.addf %11, %13 : vector<256x128xf32>
    %cst_12 = arith.constant 0.000000e+00 : f32
    %15 = vector.broadcast %cst_12 : f32 to vector<256x128xf32>
    %16 = arith.maximumf %14, %15 : vector<256x128xf32>
    %17 = arith.truncf %16 : vector<256x128xf32> to vector<256x128xbf16>
    %c0_13 = arith.constant 0 : index
    %c0_14 = arith.constant 0 : index
    %18 = vector.load %arg7[%c0_13, %c0_14] : memref<128x128xbf16, #tpu.memory_space<vmem>>, vector<128x128xbf16>
    %cst_15 = arith.constant dense<0.000000e+00> : vector<256x128xf32>
    %19 = tpu.matmul %17, %18, %cst_15 {dimension_numbers = #tpu.dot_dimension_numbers<[1], [0], [0], [1], [0, 0, 1, 1], [], []>} : vector<256x128xbf16>, vector<128x128xbf16>, vector<256x128xf32> -> vector<256x128xf32>
    %c0_16 = arith.constant 0 : index
    %c0_17 = arith.constant 0 : index
    %20 = vector.load %arg8[%c0_16, %c0_17] : memref<1x128xf32, #tpu.memory_space<vmem>>, vector<1x128xf32>
    %21 = vector.broadcast %20 : vector<1x128xf32> to vector<256x128xf32>
    %22 = arith.addf %19, %21 : vector<256x128xf32>
    %23 = vector.shape_cast %22 : vector<256x128xf32> to vector<16x16x128xf32>
    %cst_18 = arith.constant dense<0.000000e+00> : vector<16x128xf32>
    %24 = vector.multi_reduction <add>, %23, %cst_18 [1] : vector<16x16x128xf32> to vector<16x128xf32>
    %cst_19 = arith.constant 1.600000e+01 : f32
    %25 = vector.broadcast %cst_19 : f32 to vector<16x128xf32>
    %26 = arith.divf %24, %25 : vector<16x128xf32>
    %cst_20 = arith.constant dense<0xFF800000> : vector<16x128xf32>
    %27 = vector.multi_reduction <maximumf>, %23, %cst_20 [1] : vector<16x16x128xf32> to vector<16x128xf32>
    %28 = arith.truncf %26 : vector<16x128xf32> to vector<16x128xbf16>
    %c0_21 = arith.constant 0 : index
    %c0_22 = arith.constant 0 : index
    %29 = vector.load %arg9[%c0_21, %c0_22] : memref<128x128xbf16, #tpu.memory_space<vmem>>, vector<128x128xbf16>
    %cst_23 = arith.constant dense<0.000000e+00> : vector<16x128xf32>
    %30 = tpu.matmul %28, %29, %cst_23 {dimension_numbers = #tpu.dot_dimension_numbers<[1], [0], [0], [1], [0, 0, 1, 1], [], []>} : vector<16x128xbf16>, vector<128x128xbf16>, vector<16x128xf32> -> vector<16x128xf32>
    %31 = arith.truncf %27 : vector<16x128xf32> to vector<16x128xbf16>
    %c0_24 = arith.constant 0 : index
    %c0_25 = arith.constant 0 : index
    %32 = vector.load %arg10[%c0_24, %c0_25] : memref<128x128xbf16, #tpu.memory_space<vmem>>, vector<128x128xbf16>
    %cst_26 = arith.constant dense<0.000000e+00> : vector<16x128xf32>
    %33 = tpu.matmul %31, %32, %cst_26 {dimension_numbers = #tpu.dot_dimension_numbers<[1], [0], [0], [1], [0, 0, 1, 1], [], []>} : vector<16x128xbf16>, vector<128x128xbf16>, vector<16x128xf32> -> vector<16x128xf32>
    %34 = arith.addf %30, %33 : vector<16x128xf32>
    %c0_27 = arith.constant 0 : index
    %c0_28 = arith.constant 0 : index
    %35 = vector.load %arg11[%c0_27, %c0_28] : memref<1x128xf32, #tpu.memory_space<vmem>>, vector<1x128xf32>
    %36 = vector.broadcast %35 : vector<1x128xf32> to vector<16x128xf32>
    %37 = arith.addf %34, %36 : vector<16x128xf32>
    %cst_29 = arith.constant 0.000000e+00 : f32
    %38 = vector.broadcast %cst_29 : f32 to vector<16x128xf32>
    %39 = arith.maximumf %37, %38 : vector<16x128xf32>
    %40 = arith.truncf %39 : vector<16x128xf32> to vector<16x128xbf16>
    %c0_30 = arith.constant 0 : index
    %c0_31 = arith.constant 0 : index
    %41 = vector.load %arg12[%c0_30, %c0_31] : memref<128x128xbf16, #tpu.memory_space<vmem>>, vector<128x128xbf16>
    %cst_32 = arith.constant dense<0.000000e+00> : vector<16x128xf32>
    %42 = tpu.matmul %40, %41, %cst_32 {dimension_numbers = #tpu.dot_dimension_numbers<[1], [0], [0], [1], [0, 0, 1, 1], [], []>} : vector<16x128xbf16>, vector<128x128xbf16>, vector<16x128xf32> -> vector<16x128xf32>
    %c0_33 = arith.constant 0 : index
    %c0_34 = arith.constant 0 : index
    %43 = vector.load %arg13[%c0_33, %c0_34] : memref<1x128xf32, #tpu.memory_space<vmem>>, vector<1x128xf32>
    %44 = vector.broadcast %43 : vector<1x128xf32> to vector<16x128xf32>
    %45 = arith.addf %42, %44 : vector<16x128xf32>
    %cst_35 = arith.constant 0.000000e+00 : f32
    %46 = vector.broadcast %cst_35 : f32 to vector<16x128xf32>
    %47 = arith.maximumf %45, %46 : vector<16x128xf32>
    %48 = arith.truncf %47 : vector<16x128xf32> to vector<16x128xbf16>
    %c0_36 = arith.constant 0 : index
    %c0_37 = arith.constant 0 : index
    %49 = vector.load %arg14[%c0_36, %c0_37] : memref<128x128xbf16, #tpu.memory_space<vmem>>, vector<128x128xbf16>
    %cst_38 = arith.constant dense<0.000000e+00> : vector<16x128xf32>
    %50 = tpu.matmul %48, %49, %cst_38 {dimension_numbers = #tpu.dot_dimension_numbers<[1], [0], [0], [1], [0, 0, 1, 1], [], []>} : vector<16x128xbf16>, vector<128x128xbf16>, vector<16x128xf32> -> vector<16x128xf32>
    %c0_39 = arith.constant 0 : index
    %c0_40 = arith.constant 0 : index
    %51 = vector.load %arg15[%c0_39, %c0_40] : memref<1x128xf32, #tpu.memory_space<vmem>>, vector<1x128xf32>
    %52 = vector.broadcast %51 : vector<1x128xf32> to vector<16x128xf32>
    %53 = arith.addf %50, %52 : vector<16x128xf32>
    %c0_41 = arith.constant 0 : index
    %c0_42 = arith.constant 0 : index
    %54 = vector.load %arg2[%c0_41, %c0_42] : memref<16x128xf32, #tpu.memory_space<vmem>>, vector<16x128xf32>
    %55 = arith.addf %54, %53 : vector<16x128xf32>
    %cst_43 = arith.constant dense<0.000000e+00> : vector<16xf32>
    %56 = vector.multi_reduction <add>, %55, %cst_43 [1] : vector<16x128xf32> to vector<16xf32>
    %57 = vector.shape_cast %56 : vector<16xf32> to vector<16x1xf32>
    %cst_44 = arith.constant 3.125000e-02 : f32
    %58 = vector.broadcast %cst_44 : f32 to vector<16x1xf32>
    %59 = arith.mulf %57, %58 : vector<16x1xf32>
    %60 = tpu.iota {dimensions = array<i32: 1>} : vector<1x128xi32>
    %c32_i32 = arith.constant 32 : i32
    %61 = vector.broadcast %c32_i32 : i32 to vector<1x128xi32>
    %62 = arith.cmpi slt, %60, %61 : vector<1x128xi32>
    %63 = vector.broadcast %59 : vector<16x1xf32> to vector<16x128xf32>
    %64 = arith.subf %55, %63 : vector<16x128xf32>
    %65 = arith.mulf %64, %64 : vector<16x128xf32>
    %cst_45 = arith.constant 0.000000e+00 : f32
    %66 = vector.shape_cast %62 : vector<1x128xi1> to vector<1x128xi1>
    %67 = vector.broadcast %66 : vector<1x128xi1> to vector<16x128xi1>
    %68 = vector.broadcast %cst_45 : f32 to vector<16x128xf32>
    %69 = arith.select %67, %65, %68 : vector<16x128xi1>, vector<16x128xf32>
    %cst_46 = arith.constant dense<0.000000e+00> : vector<16xf32>
    %70 = vector.multi_reduction <add>, %69, %cst_46 [1] : vector<16x128xf32> to vector<16xf32>
    %71 = vector.shape_cast %70 : vector<16xf32> to vector<16x1xf32>
    %cst_47 = arith.constant 3.125000e-02 : f32
    %72 = vector.broadcast %cst_47 : f32 to vector<16x1xf32>
    %73 = arith.mulf %71, %72 : vector<16x1xf32>
    %74 = vector.broadcast %59 : vector<16x1xf32> to vector<16x128xf32>
    %75 = arith.subf %55, %74 : vector<16x128xf32>
    %cst_48 = arith.constant 9.99999974E-6 : f32
    %76 = vector.broadcast %cst_48 : f32 to vector<16x1xf32>
    %77 = arith.addf %73, %76 : vector<16x1xf32>
    %78 = math.rsqrt %77 : vector<16x1xf32>
    %79 = vector.broadcast %78 : vector<16x1xf32> to vector<16x128xf32>
    %80 = arith.mulf %75, %79 : vector<16x128xf32>
    %c0_49 = arith.constant 0 : index
    %c0_50 = arith.constant 0 : index
    %81 = vector.load %arg16[%c0_49, %c0_50] : memref<1x128xf32, #tpu.memory_space<vmem>>, vector<1x128xf32>
    %82 = vector.broadcast %81 : vector<1x128xf32> to vector<16x128xf32>
    %83 = arith.mulf %80, %82 : vector<16x128xf32>
    %c0_51 = arith.constant 0 : index
    %c0_52 = arith.constant 0 : index
    %84 = vector.load %arg17[%c0_51, %c0_52] : memref<1x128xf32, #tpu.memory_space<vmem>>, vector<1x128xf32>
    %85 = vector.broadcast %84 : vector<1x128xf32> to vector<16x128xf32>
    %86 = arith.addf %83, %85 : vector<16x128xf32>
    %c0_53 = arith.constant 0 : index
    %c0_54 = arith.constant 0 : index
    %87 = vector.load %arg18[%c0_53, %c0_54] : memref<16x128xf32, #tpu.memory_space<vmem>>, vector<16x128xf32>
    tpu.vector_store %arg18[%c0_53, %c0_54], %86 {strides = array<i32>} : memref<16x128xf32, #tpu.memory_space<vmem>>, vector<16x128xf32>,
    return
  }
  func.func @transform_0(%arg0: i32) -> (i32, i32, i32) {
    %c0_i32 = arith.constant 0 : i32
    %c0_i32_0 = arith.constant 0 : i32
    %c0_i32_1 = arith.constant 0 : i32
    return %arg0, %c0_i32, %c0_i32_0 : i32, i32, i32
  }
  func.func @transform_1(%arg0: i32) -> (i32, i32) {
    %c0_i32 = arith.constant 0 : i32
    %c0_i32_0 = arith.constant 0 : i32
    return %arg0, %c0_i32 : i32, i32
  }
  func.func @transform_2(%arg0: i32) -> (i32, i32) {
    %c0_i32 = arith.constant 0 : i32
    %c0_i32_0 = arith.constant 0 : i32
    %c0_i32_1 = arith.constant 0 : i32
    return %c0_i32, %c0_i32_0 : i32, i32
  }
  func.func @transform_3(%arg0: i32) -> (i32, i32) {
    %c0_i32 = arith.constant 0 : i32
    %c0_i32_0 = arith.constant 0 : i32
    %c0_i32_1 = arith.constant 0 : i32
    return %c0_i32, %c0_i32_0 : i32, i32
  }
  func.func @transform_4(%arg0: i32) -> (i32, i32) {
    %c0_i32 = arith.constant 0 : i32
    %c0_i32_0 = arith.constant 0 : i32
    %c0_i32_1 = arith.constant 0 : i32
    return %c0_i32, %c0_i32_0 : i32, i32
  }
  func.func @transform_5(%arg0: i32) -> (i32, i32) {
    %c0_i32 = arith.constant 0 : i32
    %c0_i32_0 = arith.constant 0 : i32
    %c0_i32_1 = arith.constant 0 : i32
    return %c0_i32, %c0_i32_0 : i32, i32
  }
  func.func @transform_6(%arg0: i32) -> (i32, i32) {
    %c0_i32 = arith.constant 0 : i32
    %c0_i32_0 = arith.constant 0 : i32
    %c0_i32_1 = arith.constant 0 : i32
    return %c0_i32, %c0_i32_0 : i32, i32
  }
  func.func @transform_7(%arg0: i32) -> (i32, i32) {
    %c0_i32 = arith.constant 0 : i32
    %c0_i32_0 = arith.constant 0 : i32
    %c0_i32_1 = arith.constant 0 : i32
    return %c0_i32, %c0_i32_0 : i32, i32
  }
  func.func @transform_8(%arg0: i32) -> (i32, i32) {
    %c0_i32 = arith.constant 0 : i32
    %c0_i32_0 = arith.constant 0 : i32
    %c0_i32_1 = arith.constant 0 : i32
    return %c0_i32, %c0_i32_0 : i32, i32
  }
  func.func @transform_9(%arg0: i32) -> (i32, i32) {
    %c0_i32 = arith.constant 0 : i32
    %c0_i32_0 = arith.constant 0 : i32
    %c0_i32_1 = arith.constant 0 : i32
    return %c0_i32, %c0_i32_0 : i32, i32
  }
  func.func @transform_10(%arg0: i32) -> (i32, i32) {
    %c0_i32 = arith.constant 0 : i32
    %c0_i32_0 = arith.constant 0 : i32
    %c0_i32_1 = arith.constant 0 : i32
    return %c0_i32, %c0_i32_0 : i32, i32
  }
  func.func @transform_11(%arg0: i32) -> (i32, i32) {
    %c0_i32 = arith.constant 0 : i32
    %c0_i32_0 = arith.constant 0 : i32
    %c0_i32_1 = arith.constant 0 : i32
    return %c0_i32, %c0_i32_0 : i32, i32
  }
  func.func @transform_12(%arg0: i32) -> (i32, i32) {
    %c0_i32 = arith.constant 0 : i32
    %c0_i32_0 = arith.constant 0 : i32
    %c0_i32_1 = arith.constant 0 : i32
    return %c0_i32, %c0_i32_0 : i32, i32
  }
  func.func @transform_13(%arg0: i32) -> (i32, i32) {
    %c0_i32 = arith.constant 0 : i32
    %c0_i32_0 = arith.constant 0 : i32
    %c0_i32_1 = arith.constant 0 : i32
    return %c0_i32, %c0_i32_0 : i32, i32
  }
  func.func @transform_14(%arg0: i32) -> (i32, i32) {
    %c0_i32 = arith.constant 0 : i32
    %c0_i32_0 = arith.constant 0 : i32
    %c0_i32_1 = arith.constant 0 : i32
    return %c0_i32, %c0_i32_0 : i32, i32
  }
  func.func @transform_15(%arg0: i32) -> (i32, i32) {
    %c0_i32 = arith.constant 0 : i32
    %c0_i32_0 = arith.constant 0 : i32
    %c0_i32_1 = arith.constant 0 : i32
    return %c0_i32, %c0_i32_0 : i32, i32
  }
  func.func @transform_16(%arg0: i32) -> (i32, i32) {
    %c0_i32 = arith.constant 0 : i32
    %c0_i32_0 = arith.constant 0 : i32
    %c0_i32_1 = arith.constant 0 : i32
    return %c0_i32, %c0_i32_0 : i32, i32
  }
  func.func @transform_17(%arg0: i32) -> (i32, i32) {
    %c0_i32 = arith.constant 0 : i32
    %c0_i32_0 = arith.constant 0 : i32
    return %arg0, %c0_i32 : i32, i32
  }
}

</mosaic_0001>

<llo_original>
// kernel: tpu_custom_call.1
$region0: #{tpu_custom_call.1}
  #allocation0 [shape = 'u32[]', space=smem, size = 0x4, offset = 0x4, fixed_abs, tag = 'smem constant byte address 0x4 - core index']
  #allocation1 [shape = 'u32[144,128]{1,0:T(1,128)}', space=vmem, size = 0x12000, scoped, tag = 'internal scratch']
  %s0 = inlined_call_operand.hbm [shape: bf16[16,16,128], index: 0, kind: input, shape index: {}]
  %s1 = inlined_call_operand.hbm [shape: f32[16,128], index: 1, kind: input, shape index: {}]
  %s2 = inlined_call_operand.hbm [shape: bf16[128,128], index: 2, kind: input, shape index: {}]
  %s3 = inlined_call_operand.vmem [shape: f32[1,128], index: 3, kind: input, shape index: {}]
  %s4 = inlined_call_operand.hbm [shape: bf16[128,128], index: 4, kind: input, shape index: {}]
  %s5 = inlined_call_operand.vmem [shape: f32[1,128], index: 5, kind: input, shape index: {}]
  %s6 = inlined_call_operand.hbm [shape: bf16[128,128], index: 6, kind: input, shape index: {}]
  %s7 = inlined_call_operand.vmem [shape: f32[1,128], index: 7, kind: input, shape index: {}]
  %s8 = inlined_call_operand.hbm [shape: bf16[128,128], index: 8, kind: input, shape index: {}]
  %s9 = inlined_call_operand.hbm [shape: bf16[128,128], index: 9, kind: input, shape index: {}]
  %s10 = inlined_call_operand.vmem [shape: f32[1,128], index: 10, kind: input, shape index: {}]
  %s11 = inlined_call_operand.hbm [shape: bf16[128,128], index: 11, kind: input, shape index: {}]
  %s12 = inlined_call_operand.vmem [shape: f32[1,128], index: 12, kind: input, shape index: {}]
  %s13 = inlined_call_operand.hbm [shape: bf16[128,128], index: 13, kind: input, shape index: {}]
  %s14 = inlined_call_operand.vmem [shape: f32[1,128], index: 14, kind: input, shape index: {}]
  %s15 = inlined_call_operand.vmem [shape: f32[1,128], index: 15, kind: input, shape index: {}]
  %s16 = inlined_call_operand.vmem [shape: f32[1,128], index: 16, kind: input, shape index: {}]
  %s17 = inlined_call_operand.hbm [shape: f32[16,128], index: 17, kind: output, shape index: {}]
  %s18 = sld [smem:[#allocation0]]
  $region114: #{tpu_custom_call.1} parent=0
    _
  %s20 = ssub.s32 1, %s18
  %s21 = scalar_select 0, %s20, %s18
  $region1: #{tpu_custom_call.1} parent=0
    #allocation2 [shape = 'u8[65536]{0}', space=vmem, size = 0x10000, scoped, tag = 'input window, operand 0, single buffered']
    #allocation3 [shape = 's32[1]{0}', space=sflag, size = 0x4, scoped, tag = 'scoped memory for tpu_custom_call.1']
    #allocation4 [shape = 's32[1]{0}', space=sflag, size = 0x4, scoped, tag = 'scoped memory for tpu_custom_call.1']
    #allocation5 [shape = 'u8[8192]{0}', space=vmem, size = 0x2000, scoped, tag = 'input window, operand 1, single buffered']
    #allocation6 [shape = 's32[1]{0}', space=sflag, size = 0x4, scoped, tag = 'scoped memory for tpu_custom_call.1']
    #allocation7 [shape = 'u8[32768]{0}', space=vmem, size = 0x8000, scoped, tag = 'input window, operand 2, single buffered']
    #allocation8 [shape = 'u8[32768]{0}', space=vmem, size = 0x8000, scoped, tag = 'input window, operand 4, single buffered']
    #allocation9 [shape = 's32[1]{0}', space=sflag, size = 0x4, scoped, tag = 'scoped memory for tpu_custom_call.1']
    #allocation10 [shape = 'u8[32768]{0}', space=vmem, size = 0x8000, scoped, tag = 'input window, operand 6, single buffered']
    #allocation11 [shape = 'u8[32768]{0}', space=vmem, size = 0x8000, scoped, tag = 'input window, operand 8, single buffered']
    #allocation12 [shape = 's32[1]{0}', space=sflag, size = 0x4, scoped, tag = 'scoped memory for tpu_custom_call.1']
    #allocation13 [shape = 'u8[32768]{0}', space=vmem, size = 0x8000, scoped, tag = 'input window, operand 9, single buffered']
    #allocation14 [shape = 'u8[32768]{0}', space=vmem, size = 0x8000, scoped, tag = 'input window, operand 11, single buffered']
    #allocation15 [shape = 's32[1]{0}', space=sflag, size = 0x4, scoped, tag = 'scoped memory for tpu_custom_call.1']
    #allocation16 [shape = 'u8[32768]{0}', space=vmem, size = 0x8000, scoped, tag = 'input window, operand 13, single buffered']
    #allocation17 [shape = 'u8[8192]{0}', space=vmem, size = 0x2000, scoped, tag = 'output window, operand 0, single buffered']
    %22 = vsyncpa [#allocation3], 0
    %23 = vsyncpa [#allocation6], 0
    %24 = vsyncpa [#allocation9], 0
    %25 = vsyncpa [#allocation12], 0
    %26 = vsyncpa [#allocation15], 0
    %27 = vsyncpa [#allocation4], 0
    // Predicated region
    $region2: #{tpu_custom_call.1} parent=1 // pred_check
      _
    $region3: #{tpu_custom_call.1} parent=1 // pred_check_branch
      %29 = sbr.rel (0) target = $region5
    $region4: #{tpu_custom_call.1} parent=1 // pred_region
      %s31 = ssub.s32 2048, 2048
      %32 = vsyncadd [#allocation3], %s31
      %s33 = sshll.u32 [#allocation2], 4
      %s34 = int_to_ptr.vmem [resolvable:$true] %s33
      %39 = dma.hbm_to_vmem [thread:$0]  %s0, 2048, %s34, [#allocation3], 64, 64, 4
    $region5: #{tpu_custom_call.1} parent=1 // pred_fallthru
      _
    // Predicated region
    $region6: #{tpu_custom_call.1} parent=1 // pred_check
      _
    $region7: #{tpu_custom_call.1} parent=1 // pred_check_branch
      %41 = sbr.rel (0) target = $region9
    $region8: #{tpu_custom_call.1} parent=1 // pred_region
      %s43 = ssub.s32 256, 256
      %44 = vsyncadd [#allocation6], %s43
      %s45 = sshll.u32 [#allocation5], 4
      %s46 = int_to_ptr.vmem [resolvable:$true] %s45
      %51 = dma.hbm_to_vmem [thread:$0]  %s1, 256, %s46, [#allocation6], 128, 128, 8
    $region9: #{tpu_custom_call.1} parent=1 // pred_fallthru
      _
    // Predicated region
    $region10: #{tpu_custom_call.1} parent=1 // pred_check
      _
    $region11: #{tpu_custom_call.1} parent=1 // pred_check_branch
      %53 = sbr.rel (0) target = $region13
    $region12: #{tpu_custom_call.1} parent=1 // pred_region
      %s55 = ssub.s32 1024, 1024
      %56 = vsyncadd [#allocation6], %s55
      %s57 = sshll.u32 [#allocation7], 4
      %s58 = int_to_ptr.vmem [resolvable:$true] %s57
      %63 = dma.hbm_to_vmem [thread:$0]  %s2, 1024, %s58, [#allocation6], 64, 64, 4
    $region13: #{tpu_custom_call.1} parent=1 // pred_fallthru
      _
    // Predicated region
    $region14: #{tpu_custom_call.1} parent=1 // pred_check
      _
    $region15: #{tpu_custom_call.1} parent=1 // pred_check_branch
      %65 = sbr.rel (0) target = $region17
    $region16: #{tpu_custom_call.1} parent=1 // pred_region
      _
    $region17: #{tpu_custom_call.1} parent=1 // pred_fallthru
      _
    // Predicated region
    $region18: #{tpu_custom_call.1} parent=1 // pred_check
      _
    $region19: #{tpu_custom_call.1} parent=1 // pred_check_branch
      %67 = sbr.rel (0) target = $region21
    $region20: #{tpu_custom_call.1} parent=1 // pred_region
      %s69 = ssub.s32 1024, 1024
      %70 = vsyncadd [#allocation9], %s69
      %s71 = sshll.u32 [#allocation8], 4
      %s72 = int_to_ptr.vmem [resolvable:$true] %s71
      %77 = dma.hbm_to_vmem [thread:$0]  %s4, 1024, %s72, [#allocation9], 64, 64, 4
    $region21: #{tpu_custom_call.1} parent=1 // pred_fallthru
      _
    // Predicated region
    $region22: #{tpu_custom_call.1} parent=1 // pred_check
      _
    $region23: #{tpu_custom_call.1} parent=1 // pred_check_branch
      %79 = sbr.rel (0) target = $region25
    $region24: #{tpu_custom_call.1} parent=1 // pred_region
      _
    $region25: #{tpu_custom_call.1} parent=1 // pred_fallthru
      _
    // Predicated region
    $region26: #{tpu_custom_call.1} parent=1 // pred_check
      _
    $region27: #{tpu_custom_call.1} parent=1 // pred_check_branch
      %81 = sbr.rel (0) target = $region29
    $region28: #{tpu_custom_call.1} parent=1 // pred_region
      %s83 = ssub.s32 1024, 1024
      %84 = vsyncadd [#allocation9], %s83
      %s85 = sshll.u32 [#allocation10], 4
      %s86 = int_to_ptr.vmem [resolvable:$true] %s85
      %91 = dma.hbm_to_vmem [thread:$0]  %s6, 1024, %s86, [#allocation9], 64, 64, 4
    $region29: #{tpu_custom_call.1} parent=1 // pred_fallthru
      _
    // Predicated region
    $region30: #{tpu_custom_call.1} parent=1 // pred_check
      _
    $region31: #{tpu_custom_call.1} parent=1 // pred_check_branch
      %93 = sbr.rel (0) target = $region33
    $region32: #{tpu_custom_call.1} parent=1 // pred_region
      _
    $region33: #{tpu_custom_call.1} parent=1 // pred_fallthru
      _
    // Predicated region
    $region34: #{tpu_custom_call.1} parent=1 // pred_check
      _
    $region35: #{tpu_custom_call.1} parent=1 // pred_check_branch
      %95 = sbr.rel (0) target = $region37
    $region36: #{tpu_custom_call.1} parent=1 // pred_region
      %s97 = ssub.s32 1024, 1024
      %98 = vsyncadd [#allocation12], %s97
      %s99 = sshll.u32 [#allocation11], 4
      %s100 = int_to_ptr.vmem [resolvable:$true] %s99
      %105 = dma.hbm_to_vmem [thread:$0]  %s8, 1024, %s100, [#allocation12], 64, 64, 4
    $region37: #{tpu_custom_call.1} parent=1 // pred_fallthru
      _
    // Predicated region
    $region38: #{tpu_custom_call.1} parent=1 // pred_check
      _
    $region39: #{tpu_custom_call.1} parent=1 // pred_check_branch
      %107 = sbr.rel (0) target = $region41
    $region40: #{tpu_custom_call.1} parent=1 // pred_region
      %s109 = ssub.s32 1024, 1024
      %110 = vsyncadd [#allocation12], %s109
      %s111 = sshll.u32 [#allocation13], 4
      %s112 = int_to_ptr.vmem [resolvable:$true] %s111
      %117 = dma.hbm_to_vmem [thread:$0]  %s9, 1024, %s112, [#allocation12], 64, 64, 4
    $region41: #{tpu_custom_call.1} parent=1 // pred_fallthru
      _
    // Predicated region
    $region42: #{tpu_custom_call.1} parent=1 // pred_check
      _
    $region43: #{tpu_custom_call.1} parent=1 // pred_check_branch
      %119 = sbr.rel (0) target = $region45
    $region44: #{tpu_custom_call.1} parent=1 // pred_region
      _
    $region45: #{tpu_custom_call.1} parent=1 // pred_fallthru
      _
    // Predicated region
    $region46: #{tpu_custom_call.1} parent=1 // pred_check
      _
    $region47: #{tpu_custom_call.1} parent=1 // pred_check_branch
      %121 = sbr.rel (0) target = $region49
    $region48: #{tpu_custom_call.1} parent=1 // pred_region
      %s123 = ssub.s32 1024, 1024
      %124 = vsyncadd [#allocation15], %s123
      %s125 = sshll.u32 [#allocation14], 4
      %s126 = int_to_ptr.vmem [resolvable:$true] %s125
      %131 = dma.hbm_to_vmem [thread:$0]  %s11, 1024, %s126, [#allocation15], 64, 64, 4
    $region49: #{tpu_custom_call.1} parent=1 // pred_fallthru
      _
    // Predicated region
    $region50: #{tpu_custom_call.1} parent=1 // pred_check
      _
    $region51: #{tpu_custom_call.1} parent=1 // pred_check_branch
      %133 = sbr.rel (0) target = $region53
    $region52: #{tpu_custom_call.1} parent=1 // pred_region
      _
    $region53: #{tpu_custom_call.1} parent=1 // pred_fallthru
      _
    // Predicated region
    $region54: #{tpu_custom_call.1} parent=1 // pred_check
      _
    $region55: #{tpu_custom_call.1} parent=1 // pred_check_branch
      %135 = sbr.rel (0) target = $region57
    $region56: #{tpu_custom_call.1} parent=1 // pred_region
      %s137 = ssub.s32 1024, 1024
      %138 = vsyncadd [#allocation15], %s137
      %s139 = sshll.u32 [#allocation16], 4
      %s140 = int_to_ptr.vmem [resolvable:$true] %s139
      %145 = dma.hbm_to_vmem [thread:$0]  %s13, 1024, %s140, [#allocation15], 64, 64, 4
    $region57: #{tpu_custom_call.1} parent=1 // pred_fallthru
      _
    // Predicated region
    $region58: #{tpu_custom_call.1} parent=1 // pred_check
      _
    $region59: #{tpu_custom_call.1} parent=1 // pred_check_branch
      %147 = sbr.rel (0) target = $region61
    $region60: #{tpu_custom_call.1} parent=1 // pred_region
      _
    $region61: #{tpu_custom_call.1} parent=1 // pred_fallthru
      _
    // Predicated region
    $region62: #{tpu_custom_call.1} parent=1 // pred_check
      _
    $region63: #{tpu_custom_call.1} parent=1 // pred_check_branch
      %149 = sbr.rel (0) target = $region65
    $region64: #{tpu_custom_call.1} parent=1 // pred_region
      _
    $region65: #{tpu_custom_call.1} parent=1 // pred_fallthru
      _
    // Predicated region
    $region66: #{tpu_custom_call.1} parent=1 // pred_check
      _
    $region67: #{tpu_custom_call.1} parent=1 // pred_check_branch
      %151 = sbr.rel (0) target = $region69
    $region68: #{tpu_custom_call.1} parent=1 // pred_region
      _
    $region69: #{tpu_custom_call.1} parent=1 // pred_fallthru
      _
    // Predicated region
    $region70: #{tpu_custom_call.1} parent=1 // pred_check
      _
    $region71: #{tpu_custom_call.1} parent=1 // pred_check_branch
      %153 = sbr.rel (0) target = $region73
    $region72: #{tpu_custom_call.1} parent=1 // pred_region
      %154 = dma.done [#allocation3], 2048
    $region73: #{tpu_custom_call.1} parent=1 // pred_fallthru
      _
    // Predicated region
    $region74: #{tpu_custom_call.1} parent=1 // pred_check
      _
    $region75: #{tpu_custom_call.1} parent=1 // pred_check_branch
      %156 = sbr.rel (0) target = $region77
    $region76: #{tpu_custom_call.1} parent=1 // pred_region
      %157 = dma.done [#allocation6], 256
    $region77: #{tpu_custom_call.1} parent=1 // pred_fallthru
      _
    // Predicated region
    $region78: #{tpu_custom_call.1} parent=1 // pred_check
      _
    $region79: #{tpu_custom_call.1} parent=1 // pred_check_branch
      %159 = sbr.rel (0) target = $region81
    $region80: #{tpu_custom_call.1} parent=1 // pred_region
      %160 = dma.done [#allocation6], 1024
    $region81: #{tpu_custom_call.1} parent=1 // pred_fallthru
      _
    // Predicated region
    $region82: #{tpu_custom_call.1} parent=1 // pred_check
      _
    $region83: #{tpu_custom_call.1} parent=1 // pred_check_branch
      %162 = sbr.rel (0) target = $region85
    $region84: #{tpu_custom_call.1} parent=1 // pred_region
      %163 = dma.done [#allocation9], 1024
    $region85: #{tpu_custom_call.1} parent=1 // pred_fallthru
      _
    // Predicated region
    $region86: #{tpu_custom_call.1} parent=1 // pred_check
      _
    $region87: #{tpu_custom_call.1} parent=1 // pred_check_branch
      %165 = sbr.rel (0) target = $region89
    $region88: #{tpu_custom_call.1} parent=1 // pred_region
      %166 = dma.done [#allocation9], 1024
    $region89: #{tpu_custom_call.1} parent=1 // pred_fallthru
      _
    // Predicated region
    $region90: #{tpu_custom_call.1} parent=1 // pred_check
      _
    $region91: #{tpu_custom_call.1} parent=1 // pred_check_branch
      %168 = sbr.rel (0) target = $region93
    $region92: #{tpu_custom_call.1} parent=1 // pred_region
      %169 = dma.done [#allocation12], 1024
    $region93: #{tpu_custom_call.1} parent=1 // pred_fallthru
      _
    // Predicated region
    $region94: #{tpu_custom_call.1} parent=1 // pred_check
      _
    $region95: #{tpu_custom_call.1} parent=1 // pred_check_branch
      %171 = sbr.rel (0) target = $region97
    $region96: #{tpu_custom_call.1} parent=1 // pred_region
      %172 = dma.done [#allocation12], 1024
    $region97: #{tpu_custom_call.1} parent=1 // pred_fallthru
      _
    // Predicated region
    $region98: #{tpu_custom_call.1} parent=1 // pred_check
      _
    $region99: #{tpu_custom_call.1} parent=1 // pred_check_branch
      %174 = sbr.rel (0) target = $region101
    $region100: #{tpu_custom_call.1} parent=1 // pred_region
      %175 = dma.done [#allocation15], 1024
    $region101: #{tpu_custom_call.1} parent=1 // pred_fallthru
      _
    // Predicated region
    $region102: #{tpu_custom_call.1} parent=1 // pred_check
      _
    $region103: #{tpu_custom_call.1} parent=1 // pred_check_branch
      %177 = sbr.rel (0) target = $region105
    $region104: #{tpu_custom_call.1} parent=1 // pred_region
      %178 = dma.done [#allocation15], 1024
    $region105: #{tpu_custom_call.1} parent=1 // pred_fallthru
      _
    %v180 = vld [vmem:[#allocation2] sm:$0xf]
    %v181 = vld [vmem:[#allocation2 + $0x4] sm:$0xf]
    %v182 = vld [vmem:[#allocation2 + $0x8] sm:$0xf]
    %v183 = vld [vmem:[#allocation2 + $0xc] sm:$0xf]
    %v184 = vld [vmem:[#allocation2 + $0x10] sm:$0xf]
    %v185 = vld [vmem:[#allocation2 + $0x14] sm:$0xf]
    %v186 = vld [vmem:[#allocation2 + $0x18] sm:$0xf]
    %v187 = vld [vmem:[#allocation2 + $0x1c] sm:$0xf]
    %v188 = vld [vmem:[#allocation2 + $0x20] sm:$0xf]
    %v189 = vld [vmem:[#allocation2 + $0x24] sm:$0xf]
    %v190 = vld [vmem:[#allocation2 + $0x28] sm:$0xf]
    %v191 = vld [vmem:[#allocation2 + $0x2c] sm:$0xf]
    %v192 = vld [vmem:[#allocation2 + $0x30] sm:$0xf]
    %v193 = vld [vmem:[#allocation2 + $0x34] sm:$0xf]
    %v194 = vld [vmem:[#allocation2 + $0x38] sm:$0xf]
    %v195 = vld [vmem:[#allocation2 + $0x3c] sm:$0xf]
    %v196 = vld [vmem:[#allocation2 + $0x40] sm:$0xf]
    %v197 = vld [vmem:[#allocation2 + $0x44] sm:$0xf]
    %v198 = vld [vmem:[#allocation2 + $0x48] sm:$0xf]
    %v199 = vld [vmem:[#allocation2 + $0x4c] sm:$0xf]
    %v200 = vld [vmem:[#allocation2 + $0x50] sm:$0xf]
    %v201 = vld [vmem:[#allocation2 + $0x54] sm:$0xf]
    %v202 = vld [vmem:[#allocation2 + $0x58] sm:$0xf]
    %v203 = vld [vmem:[#allocation2 + $0x5c] sm:$0xf]
    %v204 = vld [vmem:[#allocation2 + $0x60] sm:$0xf]
    %v205 = vld [vmem:[#allocation2 + $0x64] sm:$0xf]
    %v206 = vld [vmem:[#allocation2 + $0x68] sm:$0xf]
    %v207 = vld [vmem:[#allocation2 + $0x6c] sm:$0xf]
    %v208 = vld [vmem:[#allocation2 + $0x70] sm:$0xf]
    %v209 = vld [vmem:[#allocation2 + $0x74] sm:$0xf]
    %v210 = vld [vmem:[#allocation2 + $0x78] sm:$0xf]
    %v211 = vld [vmem:[#allocation2 + $0x7c] sm:$0xf]
    %v212 = vld [vmem:[#allocation7] sm:$0xf]
    %v213 = vld [vmem:[#allocation7 + $0x4] sm:$0xf]
    %v214 = vld [vmem:[#allocation7 + $0x8] sm:$0xf]
    %v215 = vld [vmem:[#allocation7 + $0xc] sm:$0xf]
    %v216 = vld [vmem:[#allocation7 + $0x10] sm:$0xf]
    %v217 = vld [vmem:[#allocation7 + $0x14] sm:$0xf]
    %v218 = vld [vmem:[#allocation7 + $0x18] sm:$0xf]
    %v219 = vld [vmem:[#allocation7 + $0x1c] sm:$0xf]
    %v220 = vld [vmem:[#allocation7 + $0x20] sm:$0xf]
    %v221 = vld [vmem:[#allocation7 + $0x24] sm:$0xf]
    %v222 = vld [vmem:[#allocation7 + $0x28] sm:$0xf]
    %v223 = vld [vmem:[#allocation7 + $0x2c] sm:$0xf]
    %v224 = vld [vmem:[#allocation7 + $0x30] sm:$0xf]
    %v225 = vld [vmem:[#allocation7 + $0x34] sm:$0xf]
    %v226 = vld [vmem:[#allocation7 + $0x38] sm:$0xf]
    %v227 = vld [vmem:[#allocation7 + $0x3c] sm:$0xf]
    %v228 = vld [vmem:[%s3] sm:$0x1]
    %v230 = vlaneseq
    %v231 = vshrl.u32 %v230, 7
    %v232 = vsub.s32 0, %v231
    %v233 = vrot.slane %v228, %v232
    %v267 = vunpack.c.l.b16 %v180
    %v268 = vunpack.c.l.b16 %v181
    %v269 = vunpack.c.l.b16 %v182
    %v270 = vunpack.c.l.b16 %v183
    %v271 = vunpack.c.l.b16 %v184
    %v272 = vunpack.c.l.b16 %v185
    %v273 = vunpack.c.l.b16 %v186
    %v274 = vunpack.c.l.b16 %v187
    %v275 = vunpack.c.l.b16 %v188
    %v276 = vunpack.c.l.b16 %v189
    %v277 = vunpack.c.l.b16 %v190
    %v278 = vunpack.c.l.b16 %v191
    %v279 = vunpack.c.l.b16 %v192
    %v280 = vunpack.c.l.b16 %v193
    %v281 = vunpack.c.l.b16 %v194
    %v282 = vunpack.c.l.b16 %v195
    %v283 = vunpack.c.l.b16 %v196
    %v284 = vunpack.c.l.b16 %v197
    %v285 = vunpack.c.l.b16 %v198
    %v286 = vunpack.c.l.b16 %v199
    %v287 = vunpack.c.l.b16 %v200
    %v288 = vunpack.c.l.b16 %v201
    %v289 = vunpack.c.l.b16 %v202
    %v290 = vunpack.c.l.b16 %v203
    %v291 = vunpack.c.l.b16 %v204
    %v292 = vunpack.c.l.b16 %v205
    %v293 = vunpack.c.l.b16 %v206
    %v294 = vunpack.c.l.b16 %v207
    %v295 = vunpack.c.l.b16 %v208
    %v296 = vunpack.c.l.b16 %v209
    %v297 = vunpack.c.l.b16 %v210
    %v298 = vunpack.c.l.b16 %v211
    %v299 = vpack.c.b16 %v268, %v267
    %v300 = vpack.c.b16 %v270, %v269
    %v301 = vpack.c.b16 %v272, %v271
    %v302 = vpack.c.b16 %v274, %v273
    %v303 = vpack.c.b16 %v276, %v275
    %v304 = vpack.c.b16 %v278, %v277
    %v305 = vpack.c.b16 %v280, %v279
    %v306 = vpack.c.b16 %v282, %v281
    %v307 = vpack.c.b16 %v284, %v283
    %v308 = vpack.c.b16 %v286, %v285
    %v309 = vpack.c.b16 %v288, %v287
    %v310 = vpack.c.b16 %v290, %v289
    %v311 = vpack.c.b16 %v292, %v291
    %v312 = vpack.c.b16 %v294, %v293
    %v313 = vpack.c.b16 %v296, %v295
    %v314 = vpack.c.b16 %v298, %v297
    %v347 = vunpack.c.l.b16 %v212
    %v348 = vunpack.c.l.b16 %v213
    %v349 = vunpack.c.l.b16 %v214
    %v350 = vunpack.c.l.b16 %v215
    %v351 = vunpack.c.l.b16 %v216
    %v352 = vunpack.c.l.b16 %v217
    %v353 = vunpack.c.l.b16 %v218
    %v354 = vunpack.c.l.b16 %v219
    %v355 = vunpack.c.l.b16 %v220
    %v356 = vunpack.c.l.b16 %v221
    %v357 = vunpack.c.l.b16 %v222
    %v358 = vunpack.c.l.b16 %v223
    %v359 = vunpack.c.l.b16 %v224
    %v360 = vunpack.c.l.b16 %v225
    %v361 = vunpack.c.l.b16 %v226
    %v362 = vunpack.c.l.b16 %v227
    %v363 = vpack.c.b16 %v348, %v347
    %v364 = vpack.c.b16 %v350, %v349
    %v365 = vpack.c.b16 %v352, %v351
    %v366 = vpack.c.b16 %v354, %v353
    %v367 = vpack.c.b16 %v356, %v355
    %v368 = vpack.c.b16 %v358, %v357
    %v369 = vpack.c.b16 %v360, %v359
    %v370 = vpack.c.b16 %v362, %v361
    %379 = vmatprep.subr.bf16.mxu0 0
    %380 = vmatpush1.bf16.msra.mxu0 %v363
    %381 = vmatprep.subr.bf16.mxu0 0
    %382 = vmatpush1.bf16.msra.mxu0 %v364
    %383 = vmatprep.subr.bf16.mxu0 0
    %384 = vmatpush1.bf16.msra.mxu0 %v365
    %385 = vmatprep.subr.bf16.mxu0 0
    %386 = vmatpush1.bf16.msra.mxu0 %v366
    %387 = vmatprep.subr.bf16.mxu0 0
    %388 = vmatpush1.bf16.msra.mxu0 %v367
    %389 = vmatprep.subr.bf16.mxu0 0
    %390 = vmatpush1.bf16.msra.mxu0 %v368
    %391 = vmatprep.subr.bf16.mxu0 0
    %392 = vmatpush1.bf16.msra.mxu0 %v369
    %393 = vmatprep.subr.bf16.mxu0 0
    %394 = vmatpush1.bf16.msra.mxu0 %v370
    %395 = vmatprep.subr.bf16.mxu0 0
    %396 = vmatpush1.bf16.msra.mxu0 0
    %397 = vmatprep.subr.bf16.mxu0 0
    %398 = vmatpush1.bf16.msra.mxu0 0
    %399 = vmatprep.subr.bf16.mxu0 0
    %400 = vmatpush1.bf16.msra.mxu0 0
    %401 = vmatprep.subr.bf16.mxu0 0
    %402 = vmatpush1.bf16.msra.mxu0 0
    %403 = vmatprep.subr.bf16.mxu0 0
    %404 = vmatpush1.bf16.msra.mxu0 0
    %405 = vmatprep.subr.bf16.mxu0 0
    %406 = vmatpush1.bf16.msra.mxu0 0
    %407 = vmatprep.subr.bf16.mxu0 0
    %408 = vmatpush1.bf16.msra.mxu0 0
    %409 = vmatprep.subr.bf16.mxu0 0
    %410 = vmatpush1.bf16.msra.mxu0 0
    %411 = vmatprep.mubr.bf16.mxu0 0
    %412 = vmatmul.mubr.bf16.gmra.mrb[0].mxu0 %v299
    %v413 = vpop.f32.mrb[0].mxu0
    %v414 = vadd.f32 %v233, %v413
    %v415 = vpop.f32.mrb[0].mxu0
    %v416 = vpop.f32.mrb[0].mxu0
    %v417 = vadd.f32 %v233, %v416
    %v418 = vpop.f32.mrb[0].mxu0
    %419 = vmatprep.mubr.bf16.mxu0 0
    %420 = vmatmul.mubr.bf16.gmra.mrb[0].mxu0 %v300
    %v421 = vpop.f32.mrb[0].mxu0
    %v422 = vadd.f32 %v233, %v421
    %v423 = vpop.f32.mrb[0].mxu0
    %v424 = vpop.f32.mrb[0].mxu0
    %v425 = vadd.f32 %v233, %v424
    %v426 = vpop.f32.mrb[0].mxu0
    %427 = vmatprep.mubr.bf16.mxu0 0
    %428 = vmatmul.mubr.bf16.gmra.mrb[0].mxu0 %v301
    %v429 = vpop.f32.mrb[0].mxu0
    %v430 = vadd.f32 %v233, %v429
    %v431 = vpop.f32.mrb[0].mxu0
    %v432 = vpop.f32.mrb[0].mxu0
    %v433 = vadd.f32 %v233, %v432
    %v434 = vpop.f32.mrb[0].mxu0
    %435 = vmatprep.mubr.bf16.mxu0 0
    %436 = vmatmul.mubr.bf16.gmra.mrb[0].mxu0 %v302
    %v437 = vpop.f32.mrb[0].mxu0
    %v438 = vadd.f32 %v233, %v437
    %v439 = vpop.f32.mrb[0].mxu0
    %v440 = vpop.f32.mrb[0].mxu0
    %v441 = vadd.f32 %v233, %v440
    %v442 = vpop.f32.mrb[0].mxu0
    %443 = vmatprep.mubr.bf16.mxu0 0
    %444 = vmatmul.mubr.bf16.gmra.mrb[0].mxu0 %v303
    %v445 = vpop.f32.mrb[0].mxu0
    %v446 = vadd.f32 %v233, %v445
    %v447 = vpop.f32.mrb[0].mxu0
    %v448 = vpop.f32.mrb[0].mxu0
    %v449 = vadd.f32 %v233, %v448
    %v450 = vpop.f32.mrb[0].mxu0
    %451 = vmatprep.mubr.bf16.mxu0 0
    %452 = vmatmul.mubr.bf16.gmra.mrb[0].mxu0 %v304
    %v453 = vpop.f32.mrb[0].mxu0
    %v454 = vadd.f32 %v233, %v453
    %v455 = vpop.f32.mrb[0].mxu0
    %v456 = vpop.f32.mrb[0].mxu0
    %v457 = vadd.f32 %v233, %v456
    %v458 = vpop.f32.mrb[0].mxu0
    %459 = vmatprep.mubr.bf16.mxu0 0
    %460 = vmatmul.mubr.bf16.gmra.mrb[0].mxu0 %v305
    %v461 = vpop.f32.mrb[0].mxu0
    %v462 = vadd.f32 %v233, %v461
    %v463 = vpop.f32.mrb[0].mxu0
    %v464 = vpop.f32.mrb[0].mxu0
    %v465 = vadd.f32 %v233, %v464
    %v466 = vpop.f32.mrb[0].mxu0
    %467 = vmatprep.mubr.bf16.mxu0 0
    %468 = vmatmul.mubr.bf16.gmra.mrb[0].mxu0 %v306
    %v469 = vpop.f32.mrb[0].mxu0
    %v470 = vadd.f32 %v233, %v469
    %v471 = vpop.f32.mrb[0].mxu0
    %v472 = vpop.f32.mrb[0].mxu0
    %v473 = vadd.f32 %v233, %v472
    %v474 = vpop.f32.mrb[0].mxu0
    %475 = vmatprep.mubr.bf16.mxu0 0
    %476 = vmatmul.mubr.bf16.gmra.mrb[0].mxu0 %v307
    %v477 = vpop.f32.mrb[0].mxu0
    %v478 = vadd.f32 %v233, %v477
    %v479 = vpop.f32.mrb[0].mxu0
    %v480 = vpop.f32.mrb[0].mxu0
    %v481 = vadd.f32 %v233, %v480
    %v482 = vpop.f32.mrb[0].mxu0
    %483 = vmatprep.mubr.bf16.mxu0 0
    %484 = vmatmul.mubr.bf16.gmra.mrb[0].mxu0 %v308
    %v485 = vpop.f32.mrb[0].mxu0
    %v486 = vadd.f32 %v233, %v485
    %v487 = vpop.f32.mrb[0].mxu0
    %v488 = vpop.f32.mrb[0].mxu0
    %v489 = vadd.f32 %v233, %v488
    %v490 = vpop.f32.mrb[0].mxu0
    %491 = vmatprep.mubr.bf16.mxu0 0
    %492 = vmatmul.mubr.bf16.gmra.mrb[0].mxu0 %v309
    %v493 = vpop.f32.mrb[0].mxu0
    %v494 = vadd.f32 %v233, %v493
    %v495 = vpop.f32.mrb[0].mxu0
    %v496 = vpop.f32.mrb[0].mxu0
    %v497 = vadd.f32 %v233, %v496
    %v498 = vpop.f32.mrb[0].mxu0
    %499 = vmatprep.mubr.bf16.mxu0 0
    %500 = vmatmul.mubr.bf16.gmra.mrb[0].mxu0 %v310
    %v501 = vpop.f32.mrb[0].mxu0
    %v502 = vadd.f32 %v233, %v501
    %v503 = vpop.f32.mrb[0].mxu0
    %v504 = vpop.f32.mrb[0].mxu0
    %v505 = vadd.f32 %v233, %v504
    %v506 = vpop.f32.mrb[0].mxu0
    %507 = vmatprep.mubr.bf16.mxu0 0
    %508 = vmatmul.mubr.bf16.gmra.mrb[0].mxu0 %v311
    %v509 = vpop.f32.mrb[0].mxu0
    %v510 = vadd.f32 %v233, %v509
    %v511 = vpop.f32.mrb[0].mxu0
    %v512 = vpop.f32.mrb[0].mxu0
    %v513 = vadd.f32 %v233, %v512
    %v514 = vpop.f32.mrb[0].mxu0
    %515 = vmatprep.mubr.bf16.mxu0 0
    %516 = vmatmul.mubr.bf16.gmra.mrb[0].mxu0 %v312
    %v517 = vpop.f32.mrb[0].mxu0
    %v518 = vadd.f32 %v233, %v517
    %v519 = vpop.f32.mrb[0].mxu0
    %v520 = vpop.f32.mrb[0].mxu0
    %v521 = vadd.f32 %v233, %v520
    %v522 = vpop.f32.mrb[0].mxu0
    %523 = vmatprep.mubr.bf16.mxu0 0
    %524 = vmatmul.mubr.bf16.gmra.mrb[0].mxu0 %v313
    %v525 = vpop.f32.mrb[0].mxu0
    %v526 = vadd.f32 %v233, %v525
    %v527 = vpop.f32.mrb[0].mxu0
    %v528 = vpop.f32.mrb[0].mxu0
    %v529 = vadd.f32 %v233, %v528
    %v530 = vpop.f32.mrb[0].mxu0
    %531 = vmatprep.mubr.bf16.mxu0 0
    %532 = vmatmul.mubr.bf16.gmra.mrb[0].mxu0 %v314
    %v533 = vpop.f32.mrb[0].mxu0
    %v534 = vadd.f32 %v233, %v533
    %v535 = vpop.f32.mrb[0].mxu0
    %v536 = vpop.f32.mrb[0].mxu0
    %v537 = vadd.f32 %v233, %v536
    %v538 = vpop.f32.mrb[0].mxu0
    %539 = vdwg.mxu0
    %v540 = vmax.f32 %v414, 0.0
    %v541 = vmax.f32 %v417, 0.0
    %v542 = vmax.f32 %v422, 0.0
    %v543 = vmax.f32 %v425, 0.0
    %v544 = vmax.f32 %v430, 0.0
    %v545 = vmax.f32 %v433, 0.0
    %v546 = vmax.f32 %v438, 0.0
    %v547 = vmax.f32 %v441, 0.0
    %v548 = vmax.f32 %v446, 0.0
    %v549 = vmax.f32 %v449, 0.0
    %v550 = vmax.f32 %v454, 0.0
    %v551 = vmax.f32 %v457, 0.0
    %v552 = vmax.f32 %v462, 0.0
    %v553 = vmax.f32 %v465, 0.0
    %v554 = vmax.f32 %v470, 0.0
    %v555 = vmax.f32 %v473, 0.0
    %v556 = vmax.f32 %v478, 0.0
    %v557 = vmax.f32 %v481, 0.0
    %v558 = vmax.f32 %v486, 0.0
    %v559 = vmax.f32 %v489, 0.0
    %v560 = vmax.f32 %v494, 0.0
    %v561 = vmax.f32 %v497, 0.0
    %v562 = vmax.f32 %v502, 0.0
    %v563 = vmax.f32 %v505, 0.0
    %v564 = vmax.f32 %v510, 0.0
    %v565 = vmax.f32 %v513, 0.0
    %v566 = vmax.f32 %v518, 0.0
    %v567 = vmax.f32 %v521, 0.0
    %v568 = vmax.f32 %v526, 0.0
    %v569 = vmax.f32 %v529, 0.0
    %v570 = vmax.f32 %v534, 0.0
    %v571 = vmax.f32 %v537, 0.0
    %v572 = vpack.c.bf16 %v541, %v540
    %v573 = vpack.c.bf16 %v543, %v542
    %v574 = vpack.c.bf16 %v545, %v544
    %v575 = vpack.c.bf16 %v547, %v546
    %v576 = vpack.c.bf16 %v549, %v548
    %v577 = vpack.c.bf16 %v551, %v550
    %v578 = vpack.c.bf16 %v553, %v552
    %v579 = vpack.c.bf16 %v555, %v554
    %v580 = vpack.c.bf16 %v557, %v556
    %v581 = vpack.c.bf16 %v559, %v558
    %v582 = vpack.c.bf16 %v561, %v560
    %v583 = vpack.c.bf16 %v563, %v562
    %v584 = vpack.c.bf16 %v565, %v564
    %v585 = vpack.c.bf16 %v567, %v566
    %v586 = vpack.c.bf16 %v569, %v568
    %v587 = vpack.c.bf16 %v571, %v570
    %v588 = vld [vmem:[#allocation8] sm:$0xf]
    %v589 = vld [vmem:[#allocation8 + $0x4] sm:$0xf]
    %v590 = vld [vmem:[#allocation8 + $0x8] sm:$0xf]
    %v591 = vld [vmem:[#allocation8 + $0xc] sm:$0xf]
    %v592 = vld [vmem:[#allocation8 + $0x10] sm:$0xf]
    %v593 = vld [vmem:[#allocation8 + $0x14] sm:$0xf]
    %v594 = vld [vmem:[#allocation8 + $0x18] sm:$0xf]
    %v595 = vld [vmem:[#allocation8 + $0x1c] sm:$0xf]
    %v596 = vld [vmem:[#allocation8 + $0x20] sm:$0xf]
    %v597 = vld [vmem:[#allocation8 + $0x24] sm:$0xf]
    %v598 = vld [vmem:[#allocation8 + $0x28] sm:$0xf]
    %v599 = vld [vmem:[#allocation8 + $0x2c] sm:$0xf]
    %v600 = vld [vmem:[#allocation8 + $0x30] sm:$0xf]
    %v601 = vld [vmem:[#allocation8 + $0x34] sm:$0xf]
    %v602 = vld [vmem:[#allocation8 + $0x38] sm:$0xf]
    %v603 = vld [vmem:[#allocation8 + $0x3c] sm:$0xf]
    %v604 = vld [vmem:[%s5] sm:$0x1]
    %v606 = vlaneseq
    %v607 = vshrl.u32 %v606, 7
    %v608 = vsub.s32 0, %v607
    %v609 = vrot.slane %v604, %v608
    %v627 = vunpack.c.l.b16 %v588
    %v628 = vunpack.c.l.b16 %v589
    %v629 = vunpack.c.l.b16 %v590
    %v630 = vunpack.c.l.b16 %v591
    %v631 = vunpack.c.l.b16 %v592
    %v632 = vunpack.c.l.b16 %v593
    %v633 = vunpack.c.l.b16 %v594
    %v634 = vunpack.c.l.b16 %v595
    %v635 = vunpack.c.l.b16 %v596
    %v636 = vunpack.c.l.b16 %v597
    %v637 = vunpack.c.l.b16 %v598
    %v638 = vunpack.c.l.b16 %v599
    %v639 = vunpack.c.l.b16 %v600
    %v640 = vunpack.c.l.b16 %v601
    %v641 = vunpack.c.l.b16 %v602
    %v642 = vunpack.c.l.b16 %v603
    %v643 = vpack.c.b16 %v628, %v627
    %v644 = vpack.c.b16 %v630, %v629
    %v645 = vpack.c.b16 %v632, %v631
    %v646 = vpack.c.b16 %v634, %v633
    %v647 = vpack.c.b16 %v636, %v635
    %v648 = vpack.c.b16 %v638, %v637
    %v649 = vpack.c.b16 %v640, %v639
    %v650 = vpack.c.b16 %v642, %v641
    %659 = vmatprep.subr.bf16.mxu0 0
    %660 = vmatpush1.bf16.msra.mxu0 %v643
    %661 = vmatprep.subr.bf16.mxu0 0
    %662 = vmatpush1.bf16.msra.mxu0 %v644
    %663 = vmatprep.subr.bf16.mxu0 0
    %664 = vmatpush1.bf16.msra.mxu0 %v645
    %665 = vmatprep.subr.bf16.mxu0 0
    %666 = vmatpush1.bf16.msra.mxu0 %v646
    %667 = vmatprep.subr.bf16.mxu0 0
    %668 = vmatpush1.bf16.msra.mxu0 %v647
    %669 = vmatprep.subr.bf16.mxu0 0
    %670 = vmatpush1.bf16.msra.mxu0 %v648
    %671 = vmatprep.subr.bf16.mxu0 0
    %672 = vmatpush1.bf16.msra.mxu0 %v649
    %673 = vmatprep.subr.bf16.mxu0 0
    %674 = vmatpush1.bf16.msra.mxu0 %v650
    %675 = vmatprep.subr.bf16.mxu0 0
    %676 = vmatpush1.bf16.msra.mxu0 0
    %677 = vmatprep.subr.bf16.mxu0 0
    %678 = vmatpush1.bf16.msra.mxu0 0
    %679 = vmatprep.subr.bf16.mxu0 0
    %680 = vmatpush1.bf16.msra.mxu0 0
    %681 = vmatprep.subr.bf16.mxu0 0
    %682 = vmatpush1.bf16.msra.mxu0 0
    %683 = vmatprep.subr.bf16.mxu0 0
    %684 = vmatpush1.bf16.msra.mxu0 0
    %685 = vmatprep.subr.bf16.mxu0 0
    %686 = vmatpush1.bf16.msra.mxu0 0
    %687 = vmatprep.subr.bf16.mxu0 0
    %688 = vmatpush1.bf16.msra.mxu0 0
    %689 = vmatprep.subr.bf16.mxu0 0
    %690 = vmatpush1.bf16.msra.mxu0 0
    %691 = vmatprep.mubr.bf16.mxu0 0
    %692 = vmatmul.mubr.bf16.gmra.mrb[0].mxu0 %v572
    %v693 = vpop.f32.mrb[0].mxu0
    %v694 = vadd.f32 %v609, %v693
    %v695 = vpop.f32.mrb[0].mxu0
    %v696 = vpop.f32.mrb[0].mxu0
    %v697 = vadd.f32 %v609, %v696
    %v698 = vpop.f32.mrb[0].mxu0
    %699 = vmatprep.mubr.bf16.mxu0 0
    %700 = vmatmul.mubr.bf16.gmra.mrb[0].mxu0 %v573
    %v701 = vpop.f32.mrb[0].mxu0
    %v702 = vadd.f32 %v609, %v701
    %v703 = vpop.f32.mrb[0].mxu0
    %v704 = vpop.f32.mrb[0].mxu0
    %v705 = vadd.f32 %v609, %v704
    %v706 = vpop.f32.mrb[0].mxu0
    %707 = vmatprep.mubr.bf16.mxu0 0
    %708 = vmatmul.mubr.bf16.gmra.mrb[0].mxu0 %v574
    %v709 = vpop.f32.mrb[0].mxu0
    %v710 = vadd.f32 %v609, %v709
    %v711 = vpop.f32.mrb[0].mxu0
    %v712 = vpop.f32.mrb[0].mxu0
    %v713 = vadd.f32 %v609, %v712
    %v714 = vpop.f32.mrb[0].mxu0
    %715 = vmatprep.mubr.bf16.mxu0 0
    %716 = vmatmul.mubr.bf16.gmra.mrb[0].mxu0 %v575
    %v717 = vpop.f32.mrb[0].mxu0
    %v718 = vadd.f32 %v609, %v717
    %v719 = vpop.f32.mrb[0].mxu0
    %v720 = vpop.f32.mrb[0].mxu0
    %v721 = vadd.f32 %v609, %v720
    %v722 = vpop.f32.mrb[0].mxu0
    %723 = vmatprep.mubr.bf16.mxu0 0
    %724 = vmatmul.mubr.bf16.gmra.mrb[0].mxu0 %v576
    %v725 = vpop.f32.mrb[0].mxu0
    %v726 = vadd.f32 %v609, %v725
    %v727 = vpop.f32.mrb[0].mxu0
    %v728 = vpop.f32.mrb[0].mxu0
    %v729 = vadd.f32 %v609, %v728
    %v730 = vpop.f32.mrb[0].mxu0
    %731 = vmatprep.mubr.bf16.mxu0 0
    %732 = vmatmul.mubr.bf16.gmra.mrb[0].mxu0 %v577
    %v733 = vpop.f32.mrb[0].mxu0
    %v734 = vadd.f32 %v609, %v733
    %v735 = vpop.f32.mrb[0].mxu0
    %v736 = vpop.f32.mrb[0].mxu0
    %v737 = vadd.f32 %v609, %v736
    %v738 = vpop.f32.mrb[0].mxu0
    %739 = vmatprep.mubr.bf16.mxu0 0
    %740 = vmatmul.mubr.bf16.gmra.mrb[0].mxu0 %v578
    %v741 = vpop.f32.mrb[0].mxu0
    %v742 = vadd.f32 %v609, %v741
    %v743 = vpop.f32.mrb[0].mxu0
    %v744 = vpop.f32.mrb[0].mxu0
    %v745 = vadd.f32 %v609, %v744
    %v746 = vpop.f32.mrb[0].mxu0
    %747 = vmatprep.mubr.bf16.mxu0 0
    %748 = vmatmul.mubr.bf16.gmra.mrb[0].mxu0 %v579
    %v749 = vpop.f32.mrb[0].mxu0
    %v750 = vadd.f32 %v609, %v749
    %v751 = vpop.f32.mrb[0].mxu0
    %v752 = vpop.f32.mrb[0].mxu0
    %v753 = vadd.f32 %v609, %v752
    %v754 = vpop.f32.mrb[0].mxu0
    %755 = vmatprep.mubr.bf16.mxu0 0
    %756 = vmatmul.mubr.bf16.gmra.mrb[0].mxu0 %v580
    %v757 = vpop.f32.mrb[0].mxu0
    %v758 = vadd.f32 %v609, %v757
    %v759 = vpop.f32.mrb[0].mxu0
    %v760 = vpop.f32.mrb[0].mxu0
    %v761 = vadd.f32 %v609, %v760
    %v762 = vpop.f32.mrb[0].mxu0
    %763 = vmatprep.mubr.bf16.mxu0 0
    %764 = vmatmul.mubr.bf16.gmra.mrb[0].mxu0 %v581
    %v765 = vpop.f32.mrb[0].mxu0
    %v766 = vadd.f32 %v609, %v765
    %v767 = vpop.f32.mrb[0].mxu0
    %v768 = vpop.f32.mrb[0].mxu0
    %v769 = vadd.f32 %v609, %v768
    %v770 = vpop.f32.mrb[0].mxu0
    %771 = vmatprep.mubr.bf16.mxu0 0
    %772 = vmatmul.mubr.bf16.gmra.mrb[0].mxu0 %v582
    %v773 = vpop.f32.mrb[0].mxu0
    %v774 = vadd.f32 %v609, %v773
    %v775 = vpop.f32.mrb[0].mxu0
    %v776 = vpop.f32.mrb[0].mxu0
    %v777 = vadd.f32 %v609, %v776
    %v778 = vpop.f32.mrb[0].mxu0
    %779 = vmatprep.mubr.bf16.mxu0 0
    %780 = vmatmul.mubr.bf16.gmra.mrb[0].mxu0 %v583
    %v781 = vpop.f32.mrb[0].mxu0
    %v782 = vadd.f32 %v609, %v781
    %v783 = vpop.f32.mrb[0].mxu0
    %v784 = vpop.f32.mrb[0].mxu0
    %v785 = vadd.f32 %v609, %v784
    %v786 = vpop.f32.mrb[0].mxu0
    %787 = vmatprep.mubr.bf16.mxu0 0
    %788 = vmatmul.mubr.bf16.gmra.mrb[0].mxu0 %v584
    %v789 = vpop.f32.mrb[0].mxu0
    %v790 = vadd.f32 %v609, %v789
    %v791 = vpop.f32.mrb[0].mxu0
    %v792 = vpop.f32.mrb[0].mxu0
    %v793 = vadd.f32 %v609, %v792
    %v794 = vpop.f32.mrb[0].mxu0
    %795 = vmatprep.mubr.bf16.mxu0 0
    %796 = vmatmul.mubr.bf16.gmra.mrb[0].mxu0 %v585
    %v797 = vpop.f32.mrb[0].mxu0
    %v798 = vadd.f32 %v609, %v797
    %v799 = vpop.f32.mrb[0].mxu0
    %v800 = vpop.f32.mrb[0].mxu0
    %v801 = vadd.f32 %v609, %v800
    %v802 = vpop.f32.mrb[0].mxu0
    %803 = vmatprep.mubr.bf16.mxu0 0
    %804 = vmatmul.mubr.bf16.gmra.mrb[0].mxu0 %v586
    %v805 = vpop.f32.mrb[0].mxu0
    %v806 = vadd.f32 %v609, %v805
    %v807 = vpop.f32.mrb[0].mxu0
    %v808 = vpop.f32.mrb[0].mxu0
    %v809 = vadd.f32 %v609, %v808
    %v810 = vpop.f32.mrb[0].mxu0
    %811 = vmatprep.mubr.bf16.mxu0 0
    %812 = vmatmul.mubr.bf16.gmra.mrb[0].mxu0 %v587
    %v813 = vpop.f32.mrb[0].mxu0
    %v814 = vadd.f32 %v609, %v813
    %v815 = vpop.f32.mrb[0].mxu0
    %v816 = vpop.f32.mrb[0].mxu0
    %v817 = vadd.f32 %v609, %v816
    %v818 = vpop.f32.mrb[0].mxu0
    %819 = vdwg.mxu0
    %v820 = vmax.f32 %v694, 0.0
    %v821 = vmax.f32 %v697, 0.0
    %v822 = vmax.f32 %v702, 0.0
    %v823 = vmax.f32 %v705, 0.0
    %v824 = vmax.f32 %v710, 0.0
    %v825 = vmax.f32 %v713, 0.0
    %v826 = vmax.f32 %v718, 0.0
    %v827 = vmax.f32 %v721, 0.0
    %v828 = vmax.f32 %v726, 0.0
    %v829 = vmax.f32 %v729, 0.0
    %v830 = vmax.f32 %v734, 0.0
    %v831 = vmax.f32 %v737, 0.0
    %v832 = vmax.f32 %v742, 0.0
    %v833 = vmax.f32 %v745, 0.0
    %v834 = vmax.f32 %v750, 0.0
    %v835 = vmax.f32 %v753, 0.0
    %v836 = vmax.f32 %v758, 0.0
    %v837 = vmax.f32 %v761, 0.0
    %v838 = vmax.f32 %v766, 0.0
    %v839 = vmax.f32 %v769, 0.0
    %v840 = vmax.f32 %v774, 0.0
    %v841 = vmax.f32 %v777, 0.0
    %v842 = vmax.f32 %v782, 0.0
    %v843 = vmax.f32 %v785, 0.0
    %v844 = vmax.f32 %v790, 0.0
    %v845 = vmax.f32 %v793, 0.0
    %v846 = vmax.f32 %v798, 0.0
    %v847 = vmax.f32 %v801, 0.0
    %v848 = vmax.f32 %v806, 0.0
    %v849 = vmax.f32 %v809, 0.0
    %v850 = vmax.f32 %v814, 0.0
    %v851 = vmax.f32 %v817, 0.0
    %v852 = vpack.c.bf16 %v821, %v820
    %v853 = vpack.c.bf16 %v823, %v822
    %v854 = vpack.c.bf16 %v825, %v824
    %v855 = vpack.c.bf16 %v827, %v826
    %v856 = vpack.c.bf16 %v829, %v828
    %v857 = vpack.c.bf16 %v831, %v830
    %v858 = vpack.c.bf16 %v833, %v832
    %v859 = vpack.c.bf16 %v835, %v834
    %v860 = vpack.c.bf16 %v837, %v836
    %v861 = vpack.c.bf16 %v839, %v838
    %v862 = vpack.c.bf16 %v841, %v840
    %v863 = vpack.c.bf16 %v843, %v842
    %v864 = vpack.c.bf16 %v845, %v844
    %v865 = vpack.c.bf16 %v847, %v846
    %v866 = vpack.c.bf16 %v849, %v848
    %v867 = vpack.c.bf16 %v851, %v850
    %v868 = vld [vmem:[#allocation10] sm:$0xf]
    %v869 = vld [vmem:[#allocation10 + $0x4] sm:$0xf]
    %v870 = vld [vmem:[#allocation10 + $0x8] sm:$0xf]
    %v871 = vld [vmem:[#allocation10 + $0xc] sm:$0xf]
    %v872 = vld [vmem:[#allocation10 + $0x10] sm:$0xf]
    %v873 = vld [vmem:[#allocation10 + $0x14] sm:$0xf]
    %v874 = vld [vmem:[#allocation10 + $0x18] sm:$0xf]
    %v875 = vld [vmem:[#allocation10 + $0x1c] sm:$0xf]
    %v876 = vld [vmem:[#allocation10 + $0x20] sm:$0xf]
    %v877 = vld [vmem:[#allocation10 + $0x24] sm:$0xf]
    %v878 = vld [vmem:[#allocation10 + $0x28] sm:$0xf]
    %v879 = vld [vmem:[#allocation10 + $0x2c] sm:$0xf]
    %v880 = vld [vmem:[#allocation10 + $0x30] sm:$0xf]
    %v881 = vld [vmem:[#allocation10 + $0x34] sm:$0xf]
    %v882 = vld [vmem:[#allocation10 + $0x38] sm:$0xf]
    %v883 = vld [vmem:[#allocation10 + $0x3c] sm:$0xf]
    %v884 = vld [vmem:[%s7] sm:$0x1]
    %v886 = vlaneseq
    %v887 = vshrl.u32 %v886, 7
    %v888 = vsub.s32 0, %v887
    %v889 = vrot.slane %v884, %v888
    %v907 = vunpack.c.l.b16 %v868
    %v908 = vunpack.c.l.b16 %v869
    %v909 = vunpack.c.l.b16 %v870
    %v910 = vunpack.c.l.b16 %v871
    %v911 = vunpack.c.l.b16 %v872
    %v912 = vunpack.c.l.b16 %v873
    %v913 = vunpack.c.l.b16 %v874
    %v914 = vunpack.c.l.b16 %v875
    %v915 = vunpack.c.l.b16 %v876
    %v916 = vunpack.c.l.b16 %v877
    %v917 = vunpack.c.l.b16 %v878
    %v918 = vunpack.c.l.b16 %v879
    %v919 = vunpack.c.l.b16 %v880
    %v920 = vunpack.c.l.b16 %v881
    %v921 = vunpack.c.l.b16 %v882
    %v922 = vunpack.c.l.b16 %v883
    %v923 = vpack.c.b16 %v908, %v907
    %v924 = vpack.c.b16 %v910, %v909
    %v925 = vpack.c.b16 %v912, %v911
    %v926 = vpack.c.b16 %v914, %v913
    %v927 = vpack.c.b16 %v916, %v915
    %v928 = vpack.c.b16 %v918, %v917
    %v929 = vpack.c.b16 %v920, %v919
    %v930 = vpack.c.b16 %v922, %v921
    %939 = vmatprep.subr.bf16.mxu0 0
    %940 = vmatpush1.bf16.msra.mxu0 %v923
    %941 = vmatprep.subr.bf16.mxu0 0
    %942 = vmatpush1.bf16.msra.mxu0 %v924
    %943 = vmatprep.subr.bf16.mxu0 0
    %944 = vmatpush1.bf16.msra.mxu0 %v925
    %945 = vmatprep.subr.bf16.mxu0 0
    %946 = vmatpush1.bf16.msra.mxu0 %v926
    %947 = vmatprep.subr.bf16.mxu0 0
    %948 = vmatpush1.bf16.msra.mxu0 %v927
    %949 = vmatprep.subr.bf16.mxu0 0
    %950 = vmatpush1.bf16.msra.mxu0 %v928
    %951 = vmatprep.subr.bf16.mxu0 0
    %952 = vmatpush1.bf16.msra.mxu0 %v929
    %953 = vmatprep.subr.bf16.mxu0 0
    %954 = vmatpush1.bf16.msra.mxu0 %v930
    %955 = vmatprep.subr.bf16.mxu0 0
    %956 = vmatpush1.bf16.msra.mxu0 0
    %957 = vmatprep.subr.bf16.mxu0 0
    %958 = vmatpush1.bf16.msra.mxu0 0
    %959 = vmatprep.subr.bf16.mxu0 0
    %960 = vmatpush1.bf16.msra.mxu0 0
    %961 = vmatprep.subr.bf16.mxu0 0
    %962 = vmatpush1.bf16.msra.mxu0 0
    %963 = vmatprep.subr.bf16.mxu0 0
    %964 = vmatpush1.bf16.msra.mxu0 0
    %965 = vmatprep.subr.bf16.mxu0 0
    %966 = vmatpush1.bf16.msra.mxu0 0
    %967 = vmatprep.subr.bf16.mxu0 0
    %968 = vmatpush1.bf16.msra.mxu0 0
    %969 = vmatprep.subr.bf16.mxu0 0
    %970 = vmatpush1.bf16.msra.mxu0 0
    %971 = vmatprep.mubr.bf16.mxu0 0
    %972 = vmatmul.mubr.bf16.gmra.mrb[0].mxu0 %v852
    %v973 = vpop.f32.mrb[0].mxu0
    %v974 = vadd.f32 %v889, %v973
    %v975 = vpop.f32.mrb[0].mxu0
    %v976 = vpop.f32.mrb[0].mxu0
    %v977 = vadd.f32 %v889, %v976
    %v978 = vpop.f32.mrb[0].mxu0
    %979 = vmatprep.mubr.bf16.mxu0 0
    %980 = vmatmul.mubr.bf16.gmra.mrb[0].mxu0 %v853
    %v981 = vpop.f32.mrb[0].mxu0
    %v982 = vadd.f32 %v889, %v981
    %v983 = vpop.f32.mrb[0].mxu0
    %v984 = vpop.f32.mrb[0].mxu0
    %v985 = vadd.f32 %v889, %v984
    %v986 = vpop.f32.mrb[0].mxu0
    %987 = vmatprep.mubr.bf16.mxu0 0
    %988 = vmatmul.mubr.bf16.gmra.mrb[0].mxu0 %v854
    %v989 = vpop.f32.mrb[0].mxu0
    %v990 = vadd.f32 %v889, %v989
    %v991 = vpop.f32.mrb[0].mxu0
    %v992 = vpop.f32.mrb[0].mxu0
    %v993 = vadd.f32 %v889, %v992
    %v994 = vpop.f32.mrb[0].mxu0
    %995 = vmatprep.mubr.bf16.mxu0 0
    %996 = vmatmul.mubr.bf16.gmra.mrb[0].mxu0 %v855
    %v997 = vpop.f32.mrb[0].mxu0
    %v998 = vadd.f32 %v889, %v997
    %v999 = vpop.f32.mrb[0].mxu0
    %v1000 = vpop.f32.mrb[0].mxu0
    %v1001 = vadd.f32 %v889, %v1000
    %v1002 = vpop.f32.mrb[0].mxu0
    %1003 = vmatprep.mubr.bf16.mxu0 0
    %1004 = vmatmul.mubr.bf16.gmra.mrb[0].mxu0 %v856
    %v1005 = vpop.f32.mrb[0].mxu0
    %v1006 = vadd.f32 %v889, %v1005
    %v1007 = vpop.f32.mrb[0].mxu0
    %v1008 = vpop.f32.mrb[0].mxu0
    %v1009 = vadd.f32 %v889, %v1008
    %v1010 = vpop.f32.mrb[0].mxu0
    %1011 = vmatprep.mubr.bf16.mxu0 0
    %1012 = vmatmul.mubr.bf16.gmra.mrb[0].mxu0 %v857
    %v1013 = vpop.f32.mrb[0].mxu0
    %v1014 = vadd.f32 %v889, %v1013
    %v1015 = vpop.f32.mrb[0].mxu0
    %v1016 = vpop.f32.mrb[0].mxu0
    %v1017 = vadd.f32 %v889, %v1016
    %v1018 = vpop.f32.mrb[0].mxu0
    %1019 = vmatprep.mubr.bf16.mxu0 0
    %1020 = vmatmul.mubr.bf16.gmra.mrb[0].mxu0 %v858
    %v1021 = vpop.f32.mrb[0].mxu0
    %v1022 = vadd.f32 %v889, %v1021
    %v1023 = vpop.f32.mrb[0].mxu0
    %v1024 = vpop.f32.mrb[0].mxu0
    %v1025 = vadd.f32 %v889, %v1024
    %v1026 = vpop.f32.mrb[0].mxu0
    %1027 = vmatprep.mubr.bf16.mxu0 0
    %1028 = vmatmul.mubr.bf16.gmra.mrb[0].mxu0 %v859
    %v1029 = vpop.f32.mrb[0].mxu0
    %v1030 = vadd.f32 %v889, %v1029
    %v1031 = vpop.f32.mrb[0].mxu0
    %v1032 = vpop.f32.mrb[0].mxu0
    %v1033 = vadd.f32 %v889, %v1032
    %v1034 = vpop.f32.mrb[0].mxu0
    %1035 = vmatprep.mubr.bf16.mxu0 0
    %1036 = vmatmul.mubr.bf16.gmra.mrb[0].mxu0 %v860
    %v1037 = vpop.f32.mrb[0].mxu0
    %v1038 = vadd.f32 %v889, %v1037
    %v1039 = vpop.f32.mrb[0].mxu0
    %v1040 = vpop.f32.mrb[0].mxu0
    %v1041 = vadd.f32 %v889, %v1040
    %v1042 = vpop.f32.mrb[0].mxu0
    %1043 = vmatprep.mubr.bf16.mxu0 0
    %1044 = vmatmul.mubr.bf16.gmra.mrb[0].mxu0 %v861
    %v1045 = vpop.f32.mrb[0].mxu0
    %v1046 = vadd.f32 %v889, %v1045
    %v1047 = vpop.f32.mrb[0].mxu0
    %v1048 = vpop.f32.mrb[0].mxu0
    %v1049 = vadd.f32 %v889, %v1048
    %v1050 = vpop.f32.mrb[0].mxu0
    %1051 = vmatprep.mubr.bf16.mxu0 0
    %1052 = vmatmul.mubr.bf16.gmra.mrb[0].mxu0 %v862
    %v1053 = vpop.f32.mrb[0].mxu0
    %v1054 = vadd.f32 %v889, %v1053
    %v1055 = vpop.f32.mrb[0].mxu0
    %v1056 = vpop.f32.mrb[0].mxu0
    %v1057 = vadd.f32 %v889, %v1056
    %v1058 = vpop.f32.mrb[0].mxu0
    %1059 = vmatprep.mubr.bf16.mxu0 0
    %1060 = vmatmul.mubr.bf16.gmra.mrb[0].mxu0 %v863
    %v1061 = vpop.f32.mrb[0].mxu0
    %v1062 = vadd.f32 %v889, %v1061
    %v1063 = vpop.f32.mrb[0].mxu0
    %v1064 = vpop.f32.mrb[0].mxu0
    %v1065 = vadd.f32 %v889, %v1064
    %v1066 = vpop.f32.mrb[0].mxu0
    %1067 = vmatprep.mubr.bf16.mxu0 0
    %1068 = vmatmul.mubr.bf16.gmra.mrb[0].mxu0 %v864
    %v1069 = vpop.f32.mrb[0].mxu0
    %v1070 = vadd.f32 %v889, %v1069
    %v1071 = vpop.f32.mrb[0].mxu0
    %v1072 = vpop.f32.mrb[0].mxu0
    %v1073 = vadd.f32 %v889, %v1072
    %v1074 = vpop.f32.mrb[0].mxu0
    %1075 = vmatprep.mubr.bf16.mxu0 0
    %1076 = vmatmul.mubr.bf16.gmra.mrb[0].mxu0 %v865
    %v1077 = vpop.f32.mrb[0].mxu0
    %v1078 = vadd.f32 %v889, %v1077
    %v1079 = vpop.f32.mrb[0].mxu0
    %v1080 = vpop.f32.mrb[0].mxu0
    %v1081 = vadd.f32 %v889, %v1080
    %v1082 = vpop.f32.mrb[0].mxu0
    %1083 = vmatprep.mubr.bf16.mxu0 0
    %1084 = vmatmul.mubr.bf16.gmra.mrb[0].mxu0 %v866
    %v1085 = vpop.f32.mrb[0].mxu0
    %v1086 = vadd.f32 %v889, %v1085
    %v1087 = vpop.f32.mrb[0].mxu0
    %v1088 = vpop.f32.mrb[0].mxu0
    %v1089 = vadd.f32 %v889, %v1088
    %v1090 = vpop.f32.mrb[0].mxu0
    %1091 = vmatprep.mubr.bf16.mxu0 0
    %1092 = vmatmul.mubr.bf16.gmra.mrb[0].mxu0 %v867
    %v1093 = vpop.f32.mrb[0].mxu0
    %v1094 = vadd.f32 %v889, %v1093
    %v1095 = vpop.f32.mrb[0].mxu0
    %v1096 = vpop.f32.mrb[0].mxu0
    %v1097 = vadd.f32 %v889, %v1096
    %v1098 = vpop.f32.mrb[0].mxu0
    %1099 = vdwg.mxu0
    %v1100 = vadd.f32 %v974, %v977
    %v1101 = vrot.slane %v1100, 4
    %v1102 = vadd.f32 %v1100, %v1101
    %v1103 = vrot.slane %v1102, 2
    %v1104 = vadd.f32 %v1102, %v1103
    %v1105 = vrot.slane %v1104, 1
    %v1106 = vadd.f32 %v1104, %v1105
    %v1107 = vadd.f32 %v982, %v985
    %v1108 = vrot.slane %v1107, 4
    %v1109 = vadd.f32 %v1107, %v1108
    %v1110 = vrot.slane %v1109, 2
    %v1111 = vadd.f32 %v1109, %v1110
    %v1112 = vrot.slane %v1111, 1
    %v1113 = vadd.f32 %v1111, %v1112
    %v1114 = vadd.f32 %v990, %v993
    %v1115 = vrot.slane %v1114, 4
    %v1116 = vadd.f32 %v1114, %v1115
    %v1117 = vrot.slane %v1116, 2
    %v1118 = vadd.f32 %v1116, %v1117
    %v1119 = vrot.slane %v1118, 1
    %v1120 = vadd.f32 %v1118, %v1119
    %v1121 = vadd.f32 %v998, %v1001
    %v1122 = vrot.slane %v1121, 4
    %v1123 = vadd.f32 %v1121, %v1122
    %v1124 = vrot.slane %v1123, 2
    %v1125 = vadd.f32 %v1123, %v1124
    %v1126 = vrot.slane %v1125, 1
    %v1127 = vadd.f32 %v1125, %v1126
    %v1128 = vadd.f32 %v1006, %v1009
    %v1129 = vrot.slane %v1128, 4
    %v1130 = vadd.f32 %v1128, %v1129
    %v1131 = vrot.slane %v1130, 2
    %v1132 = vadd.f32 %v1130, %v1131
    %v1133 = vrot.slane %v1132, 1
    %v1134 = vadd.f32 %v1132, %v1133
    %v1135 = vadd.f32 %v1014, %v1017
    %v1136 = vrot.slane %v1135, 4
    %v1137 = vadd.f32 %v1135, %v1136
    %v1138 = vrot.slane %v1137, 2
    %v1139 = vadd.f32 %v1137, %v1138
    %v1140 = vrot.slane %v1139, 1
    %v1141 = vadd.f32 %v1139, %v1140
    %v1142 = vadd.f32 %v1022, %v1025
    %v1143 = vrot.slane %v1142, 4
    %v1144 = vadd.f32 %v1142, %v1143
    %v1145 = vrot.slane %v1144, 2
    %v1146 = vadd.f32 %v1144, %v1145
    %v1147 = vrot.slane %v1146, 1
    %v1148 = vadd.f32 %v1146, %v1147
    %v1149 = vadd.f32 %v1030, %v1033
    %v1150 = vrot.slane %v1149, 4
    %v1151 = vadd.f32 %v1149, %v1150
    %v1152 = vrot.slane %v1151, 2
    %v1153 = vadd.f32 %v1151, %v1152
    %v1154 = vrot.slane %v1153, 1
    %v1155 = vadd.f32 %v1153, %v1154
    %v1156 = vadd.f32 %v1038, %v1041
    %v1157 = vrot.slane %v1156, 4
    %v1158 = vadd.f32 %v1156, %v1157
    %v1159 = vrot.slane %v1158, 2
    %v1160 = vadd.f32 %v1158, %v1159
    %v1161 = vrot.slane %v1160, 1
    %v1162 = vadd.f32 %v1160, %v1161
    %v1163 = vadd.f32 %v1046, %v1049
    %v1164 = vrot.slane %v1163, 4
    %v1165 = vadd.f32 %v1163, %v1164
    %v1166 = vrot.slane %v1165, 2
    %v1167 = vadd.f32 %v1165, %v1166
    %v1168 = vrot.slane %v1167, 1
    %v1169 = vadd.f32 %v1167, %v1168
    %v1170 = vadd.f32 %v1054, %v1057
    %v1171 = vrot.slane %v1170, 4
    %v1172 = vadd.f32 %v1170, %v1171
    %v1173 = vrot.slane %v1172, 2
    %v1174 = vadd.f32 %v1172, %v1173
    %v1175 = vrot.slane %v1174, 1
    %v1176 = vadd.f32 %v1174, %v1175
    %v1177 = vadd.f32 %v1062, %v1065
    %v1178 = vrot.slane %v1177, 4
    %v1179 = vadd.f32 %v1177, %v1178
    %v1180 = vrot.slane %v1179, 2
    %v1181 = vadd.f32 %v1179, %v1180
    %v1182 = vrot.slane %v1181, 1
    %v1183 = vadd.f32 %v1181, %v1182
    %v1184 = vadd.f32 %v1070, %v1073
    %v1185 = vrot.slane %v1184, 4
    %v1186 = vadd.f32 %v1184, %v1185
    %v1187 = vrot.slane %v1186, 2
    %v1188 = vadd.f32 %v1186, %v1187
    %v1189 = vrot.slane %v1188, 1
    %v1190 = vadd.f32 %v1188, %v1189
    %v1191 = vadd.f32 %v1078, %v1081
    %v1192 = vrot.slane %v1191, 4
    %v1193 = vadd.f32 %v1191, %v1192
    %v1194 = vrot.slane %v1193, 2
    %v1195 = vadd.f32 %v1193, %v1194
    %v1196 = vrot.slane %v1195, 1
    %v1197 = vadd.f32 %v1195, %v1196
    %v1198 = vadd.f32 %v1086, %v1089
    %v1199 = vrot.slane %v1198, 4
    %v1200 = vadd.f32 %v1198, %v1199
    %v1201 = vrot.slane %v1200, 2
    %v1202 = vadd.f32 %v1200, %v1201
    %v1203 = vrot.slane %v1202, 1
    %v1204 = vadd.f32 %v1202, %v1203
    %v1205 = vadd.f32 %v1094, %v1097
    %v1206 = vrot.slane %v1205, 4
    %v1207 = vadd.f32 %v1205, %v1206
    %v1208 = vrot.slane %v1207, 2
    %v1209 = vadd.f32 %v1207, %v1208
    %v1210 = vrot.slane %v1209, 1
    %v1211 = vadd.f32 %v1209, %v1210
    %v1212 = vrcp.pop 16.0
    %v1213 = vmul.f32 %v1106, %v1212
    %v1214 = vmul.f32 %v1113, %v1212
    %v1215 = vmul.f32 %v1120, %v1212
    %v1216 = vmul.f32 %v1127, %v1212
    %v1217 = vmul.f32 %v1134, %v1212
    %v1218 = vmul.f32 %v1141, %v1212
    %v1219 = vmul.f32 %v1148, %v1212
    %v1220 = vmul.f32 %v1155, %v1212
    %v1221 = vmul.f32 %v1162, %v1212
    %v1222 = vmul.f32 %v1169, %v1212
    %v1223 = vmul.f32 %v1176, %v1212
    %v1224 = vmul.f32 %v1183, %v1212
    %v1225 = vmul.f32 %v1190, %v1212
    %v1226 = vmul.f32 %v1197, %v1212
    %v1227 = vmul.f32 %v1204, %v1212
    %v1228 = vmul.f32 %v1211, %v1212
    %v1229 = vmax.f32 %v974, %v977
    %v1230 = vrot.slane %v1229, 4
    %v1231 = vmax.f32 %v1229, %v1230
    %v1232 = vrot.slane %v1231, 2
    %v1233 = vmax.f32 %v1231, %v1232
    %v1234 = vrot.slane %v1233, 1
    %v1235 = vmax.f32 %v1233, %v1234
    %v1236 = vmax.f32 %v982, %v985
    %v1237 = vrot.slane %v1236, 4
    %v1238 = vmax.f32 %v1236, %v1237
    %v1239 = vrot.slane %v1238, 2
    %v1240 = vmax.f32 %v1238, %v1239
    %v1241 = vrot.slane %v1240, 1
    %v1242 = vmax.f32 %v1240, %v1241
    %v1243 = vmax.f32 %v990, %v993
    %v1244 = vrot.slane %v1243, 4
    %v1245 = vmax.f32 %v1243, %v1244
    %v1246 = vrot.slane %v1245, 2
    %v1247 = vmax.f32 %v1245, %v1246
    %v1248 = vrot.slane %v1247, 1
    %v1249 = vmax.f32 %v1247, %v1248
    %v1250 = vmax.f32 %v998, %v1001
    %v1251 = vrot.slane %v1250, 4
    %v1252 = vmax.f32 %v1250, %v1251
    %v1253 = vrot.slane %v1252, 2
    %v1254 = vmax.f32 %v1252, %v1253
    %v1255 = vrot.slane %v1254, 1
    %v1256 = vmax.f32 %v1254, %v1255
    %v1257 = vmax.f32 %v1006, %v1009
    %v1258 = vrot.slane %v1257, 4
    %v1259 = vmax.f32 %v1257, %v1258
    %v1260 = vrot.slane %v1259, 2
    %v1261 = vmax.f32 %v1259, %v1260
    %v1262 = vrot.slane %v1261, 1
    %v1263 = vmax.f32 %v1261, %v1262
    %v1264 = vmax.f32 %v1014, %v1017
    %v1265 = vrot.slane %v1264, 4
    %v1266 = vmax.f32 %v1264, %v1265
    %v1267 = vrot.slane %v1266, 2
    %v1268 = vmax.f32 %v1266, %v1267
    %v1269 = vrot.slane %v1268, 1
    %v1270 = vmax.f32 %v1268, %v1269
    %v1271 = vmax.f32 %v1022, %v1025
    %v1272 = vrot.slane %v1271, 4
    %v1273 = vmax.f32 %v1271, %v1272
    %v1274 = vrot.slane %v1273, 2
    %v1275 = vmax.f32 %v1273, %v1274
    %v1276 = vrot.slane %v1275, 1
    %v1277 = vmax.f32 %v1275, %v1276
    %v1278 = vmax.f32 %v1030, %v1033
    %v1279 = vrot.slane %v1278, 4
    %v1280 = vmax.f32 %v1278, %v1279
    %v1281 = vrot.slane %v1280, 2
    %v1282 = vmax.f32 %v1280, %v1281
    %v1283 = vrot.slane %v1282, 1
    %v1284 = vmax.f32 %v1282, %v1283
    %v1285 = vmax.f32 %v1038, %v1041
    %v1286 = vrot.slane %v1285, 4
    %v1287 = vmax.f32 %v1285, %v1286
    %v1288 = vrot.slane %v1287, 2
    %v1289 = vmax.f32 %v1287, %v1288
    %v1290 = vrot.slane %v1289, 1
    %v1291 = vmax.f32 %v1289, %v1290
    %v1292 = vmax.f32 %v1046, %v1049
    %v1293 = vrot.slane %v1292, 4
    %v1294 = vmax.f32 %v1292, %v1293
    %v1295 = vrot.slane %v1294, 2
    %v1296 = vmax.f32 %v1294, %v1295
    %v1297 = vrot.slane %v1296, 1
    %v1298 = vmax.f32 %v1296, %v1297
    %v1299 = vmax.f32 %v1054, %v1057
    %v1300 = vrot.slane %v1299, 4
    %v1301 = vmax.f32 %v1299, %v1300
    %v1302 = vrot.slane %v1301, 2
    %v1303 = vmax.f32 %v1301, %v1302
    %v1304 = vrot.slane %v1303, 1
    %v1305 = vmax.f32 %v1303, %v1304
    %v1306 = vmax.f32 %v1062, %v1065
    %v1307 = vrot.slane %v1306, 4
    %v1308 = vmax.f32 %v1306, %v1307
    %v1309 = vrot.slane %v1308, 2
    %v1310 = vmax.f32 %v1308, %v1309
    %v1311 = vrot.slane %v1310, 1
    %v1312 = vmax.f32 %v1310, %v1311
    %v1313 = vmax.f32 %v1070, %v1073
    %v1314 = vrot.slane %v1313, 4
    %v1315 = vmax.f32 %v1313, %v1314
    %v1316 = vrot.slane %v1315, 2
    %v1317 = vmax.f32 %v1315, %v1316
    %v1318 = vrot.slane %v1317, 1
    %v1319 = vmax.f32 %v1317, %v1318
    %v1320 = vmax.f32 %v1078, %v1081
    %v1321 = vrot.slane %v1320, 4
    %v1322 = vmax.f32 %v1320, %v1321
    %v1323 = vrot.slane %v1322, 2
    %v1324 = vmax.f32 %v1322, %v1323
    %v1325 = vrot.slane %v1324, 1
    %v1326 = vmax.f32 %v1324, %v1325
    %v1327 = vmax.f32 %v1086, %v1089
    %v1328 = vrot.slane %v1327, 4
    %v1329 = vmax.f32 %v1327, %v1328
    %v1330 = vrot.slane %v1329, 2
    %v1331 = vmax.f32 %v1329, %v1330
    %v1332 = vrot.slane %v1331, 1
    %v1333 = vmax.f32 %v1331, %v1332
    %v1334 = vmax.f32 %v1094, %v1097
    %v1335 = vrot.slane %v1334, 4
    %v1336 = vmax.f32 %v1334, %v1335
    %v1337 = vrot.slane %v1336, 2
    %v1338 = vmax.f32 %v1336, %v1337
    %v1339 = vrot.slane %v1338, 1
    %v1340 = vmax.f32 %v1338, %v1339
    %v1341 = vpack.c.bf16 %v1213, %v1213
    %v1342 = vpack.c.bf16 %v1214, %v1214
    %v1343 = vpack.c.bf16 %v1215, %v1215
    %v1344 = vpack.c.bf16 %v1216, %v1216
    %v1345 = vpack.c.bf16 %v1217, %v1217
    %v1346 = vpack.c.bf16 %v1218, %v1218
    %v1347 = vpack.c.bf16 %v1219, %v1219
    %v1348 = vpack.c.bf16 %v1220, %v1220
    %v1349 = vpack.c.bf16 %v1221, %v1221
    %v1350 = vpack.c.bf16 %v1222, %v1222
    %v1351 = vpack.c.bf16 %v1223, %v1223
    %v1352 = vpack.c.bf16 %v1224, %v1224
    %v1353 = vpack.c.bf16 %v1225, %v1225
    %v1354 = vpack.c.bf16 %v1226, %v1226
    %v1355 = vpack.c.bf16 %v1227, %v1227
    %v1356 = vpack.c.bf16 %v1228, %v1228
    %v1357 = vld [vmem:[#allocation11] sm:$0xf]
    %v1358 = vld [vmem:[#allocation11 + $0x4] sm:$0xf]
    %v1359 = vld [vmem:[#allocation11 + $0x8] sm:$0xf]
    %v1360 = vld [vmem:[#allocation11 + $0xc] sm:$0xf]
    %v1361 = vld [vmem:[#allocation11 + $0x10] sm:$0xf]
    %v1362 = vld [vmem:[#allocation11 + $0x14] sm:$0xf]
    %v1363 = vld [vmem:[#allocation11 + $0x18] sm:$0xf]
    %v1364 = vld [vmem:[#allocation11 + $0x1c] sm:$0xf]
    %v1365 = vld [vmem:[#allocation11 + $0x20] sm:$0xf]
    %v1366 = vld [vmem:[#allocation11 + $0x24] sm:$0xf]
    %v1367 = vld [vmem:[#allocation11 + $0x28] sm:$0xf]
    %v1368 = vld [vmem:[#allocation11 + $0x2c] sm:$0xf]
    %v1369 = vld [vmem:[#allocation11 + $0x30] sm:$0xf]
    %v1370 = vld [vmem:[#allocation11 + $0x34] sm:$0xf]
    %v1371 = vld [vmem:[#allocation11 + $0x38] sm:$0xf]
    %v1372 = vld [vmem:[#allocation11 + $0x3c] sm:$0xf]
    %v1373 = vpack.c.bf16 %v1235, %v1235
    %v1374 = vpack.c.bf16 %v1242, %v1242
    %v1375 = vpack.c.bf16 %v1249, %v1249
    %v1376 = vpack.c.bf16 %v1256, %v1256
    %v1377 = vpack.c.bf16 %v1263, %v1263
    %v1378 = vpack.c.bf16 %v1270, %v1270
    %v1379 = vpack.c.bf16 %v1277, %v1277
    %v1380 = vpack.c.bf16 %v1284, %v1284
    %v1381 = vpack.c.bf16 %v1291, %v1291
    %v1382 = vpack.c.bf16 %v1298, %v1298
    %v1383 = vpack.c.bf16 %v1305, %v1305
    %v1384 = vpack.c.bf16 %v1312, %v1312
    %v1385 = vpack.c.bf16 %v1319, %v1319
    %v1386 = vpack.c.bf16 %v1326, %v1326
    %v1387 = vpack.c.bf16 %v1333, %v1333
    %v1388 = vpack.c.bf16 %v1340, %v1340
    %v1389 = vld [vmem:[#allocation13] sm:$0xf]
    %v1390 = vld [vmem:[#allocation13 + $0x4] sm:$0xf]
    %v1391 = vld [vmem:[#allocation13 + $0x8] sm:$0xf]
    %v1392 = vld [vmem:[#allocation13 + $0xc] sm:$0xf]
    %v1393 = vld [vmem:[#allocation13 + $0x10] sm:$0xf]
    %v1394 = vld [vmem:[#allocation13 + $0x14] sm:$0xf]
    %v1395 = vld [vmem:[#allocation13 + $0x18] sm:$0xf]
    %v1396 = vld [vmem:[#allocation13 + $0x1c] sm:$0xf]
    %v1397 = vld [vmem:[#allocation13 + $0x20] sm:$0xf]
    %v1398 = vld [vmem:[#allocation13 + $0x24] sm:$0xf]
    %v1399 = vld [vmem:[#allocation13 + $0x28] sm:$0xf]
    %v1400 = vld [vmem:[#allocation13 + $0x2c] sm:$0xf]
    %v1401 = vld [vmem:[#allocation13 + $0x30] sm:$0xf]
    %v1402 = vld [vmem:[#allocation13 + $0x34] sm:$0xf]
    %v1403 = vld [vmem:[#allocation13 + $0x38] sm:$0xf]
    %v1404 = vld [vmem:[#allocation13 + $0x3c] sm:$0xf]
    %v1421 = vunpack.c.l.b16 %v1373
    %v1422 = vunpack.c.l.b16 %v1374
    %v1423 = vunpack.c.l.b16 %v1375
    %v1424 = vunpack.c.l.b16 %v1376
    %v1425 = vunpack.c.l.b16 %v1377
    %v1426 = vunpack.c.l.b16 %v1378
    %v1427 = vunpack.c.l.b16 %v1379
    %v1428 = vunpack.c.l.b16 %v1380
    %v1429 = vunpack.c.l.b16 %v1381
    %v1430 = vunpack.c.l.b16 %v1382
    %v1431 = vunpack.c.l.b16 %v1383
    %v1432 = vunpack.c.l.b16 %v1384
    %v1433 = vunpack.c.l.b16 %v1385
    %v1434 = vunpack.c.l.b16 %v1386
    %v1435 = vunpack.c.l.b16 %v1387
    %v1436 = vunpack.c.l.b16 %v1388
    %vm1437 = vcmask 1041409
    %v1438 = vsel %vm1437, %v1422, %v1421
    %vm1439 = vcmask 1042434
    %v1440 = vsel %vm1439, %v1423, %v1438
    %vm1441 = vcmask 1043459
    %v1442 = vsel %vm1441, %v1424, %v1440
    %vm1443 = vcmask 1044484
    %v1444 = vsel %vm1443, %v1425, %v1442
    %vm1445 = vcmask 1045509
    %v1446 = vsel %vm1445, %v1426, %v1444
    %vm1447 = vcmask 1046534
    %v1448 = vsel %vm1447, %v1427, %v1446
    %vm1449 = vcmask 1047559
    %v1450 = vsel %vm1449, %v1428, %v1448
    %v1451 = vsel %vm1437, %v1430, %v1429
    %v1452 = vsel %vm1439, %v1431, %v1451
    %v1453 = vsel %vm1441, %v1432, %v1452
    %v1454 = vsel %vm1443, %v1433, %v1453
    %v1455 = vsel %vm1445, %v1434, %v1454
    %v1456 = vsel %vm1447, %v1435, %v1455
    %v1457 = vsel %vm1449, %v1436, %v1456
    %v1458 = vpack.c.b16 %v1457, %v1450
    %v1476 = vunpack.c.l.b16 %v1389
    %v1477 = vunpack.c.l.b16 %v1390
    %v1478 = vunpack.c.l.b16 %v1391
    %v1479 = vunpack.c.l.b16 %v1392
    %v1480 = vunpack.c.l.b16 %v1393
    %v1481 = vunpack.c.l.b16 %v1394
    %v1482 = vunpack.c.l.b16 %v1395
    %v1483 = vunpack.c.l.b16 %v1396
    %v1484 = vunpack.c.l.b16 %v1397
    %v1485 = vunpack.c.l.b16 %v1398
    %v1486 = vunpack.c.l.b16 %v1399
    %v1487 = vunpack.c.l.b16 %v1400
    %v1488 = vunpack.c.l.b16 %v1401
    %v1489 = vunpack.c.l.b16 %v1402
    %v1490 = vunpack.c.l.b16 %v1403
    %v1491 = vunpack.c.l.b16 %v1404
    %v1492 = vpack.c.b16 %v1477, %v1476
    %v1493 = vpack.c.b16 %v1479, %v1478
    %v1494 = vpack.c.b16 %v1481, %v1480
    %v1495 = vpack.c.b16 %v1483, %v1482
    %v1496 = vpack.c.b16 %v1485, %v1484
    %v1497 = vpack.c.b16 %v1487, %v1486
    %v1498 = vpack.c.b16 %v1489, %v1488
    %v1499 = vpack.c.b16 %v1491, %v1490
    %1508 = vmatprep.subr.bf16.mxu0 0
    %1509 = vmatpush1.bf16.msra.mxu0 %v1492
    %1510 = vmatprep.subr.bf16.mxu0 0
    %1511 = vmatpush1.bf16.msra.mxu0 %v1493
    %1512 = vmatprep.subr.bf16.mxu0 0
    %1513 = vmatpush1.bf16.msra.mxu0 %v1494
    %1514 = vmatprep.subr.bf16.mxu0 0
    %1515 = vmatpush1.bf16.msra.mxu0 %v1495
    %1516 = vmatprep.subr.bf16.mxu0 0
    %1517 = vmatpush1.bf16.msra.mxu0 %v1496
    %1518 = vmatprep.subr.bf16.mxu0 0
    %1519 = vmatpush1.bf16.msra.mxu0 %v1497
    %1520 = vmatprep.subr.bf16.mxu0 0
    %1521 = vmatpush1.bf16.msra.mxu0 %v1498
    %1522 = vmatprep.subr.bf16.mxu0 0
    %1523 = vmatpush1.bf16.msra.mxu0 %v1499
    %1524 = vmatprep.subr.bf16.mxu0 0
    %1525 = vmatpush1.bf16.msra.mxu0 0
    %1526 = vmatprep.subr.bf16.mxu0 0
    %1527 = vmatpush1.bf16.msra.mxu0 0
    %1528 = vmatprep.subr.bf16.mxu0 0
    %1529 = vmatpush1.bf16.msra.mxu0 0
    %1530 = vmatprep.subr.bf16.mxu0 0
    %1531 = vmatpush1.bf16.msra.mxu0 0
    %1532 = vmatprep.subr.bf16.mxu0 0
    %1533 = vmatpush1.bf16.msra.mxu0 0
    %1534 = vmatprep.subr.bf16.mxu0 0
    %1535 = vmatpush1.bf16.msra.mxu0 0
    %1536 = vmatprep.subr.bf16.mxu0 0
    %1537 = vmatpush1.bf16.msra.mxu0 0
    %1538 = vmatprep.subr.bf16.mxu0 0
    %1539 = vmatpush1.bf16.msra.mxu0 0
    %1540 = vmatprep.mubr.bf16.mxu0 0
    %1541 = vmatmul.mubr.bf16.gmra.mrb[0].mxu0 %v1458
    %v1542 = vpop.f32.mrb[0].mxu0
    %v1543 = vadd.f32 0.0, %v1542
    %v1544 = vpop.f32.mrb[0].mxu0
    %v1545 = vpop.f32.mrb[0].mxu0
    %v1546 = vadd.f32 0.0, %v1545
    %v1547 = vpop.f32.mrb[0].mxu0
    %1548 = vdwg.mxu0
    %v1565 = vunpack.c.l.b16 %v1341
    %v1566 = vunpack.c.l.b16 %v1342
    %v1567 = vunpack.c.l.b16 %v1343
    %v1568 = vunpack.c.l.b16 %v1344
    %v1569 = vunpack.c.l.b16 %v1345
    %v1570 = vunpack.c.l.b16 %v1346
    %v1571 = vunpack.c.l.b16 %v1347
    %v1572 = vunpack.c.l.b16 %v1348
    %v1573 = vunpack.c.l.b16 %v1349
    %v1574 = vunpack.c.l.b16 %v1350
    %v1575 = vunpack.c.l.b16 %v1351
    %v1576 = vunpack.c.l.b16 %v1352
    %v1577 = vunpack.c.l.b16 %v1353
    %v1578 = vunpack.c.l.b16 %v1354
    %v1579 = vunpack.c.l.b16 %v1355
    %v1580 = vunpack.c.l.b16 %v1356
    %v1581 = vsel %vm1437, %v1566, %v1565
    %v1582 = vsel %vm1439, %v1567, %v1581
    %v1583 = vsel %vm1441, %v1568, %v1582
    %v1584 = vsel %vm1443, %v1569, %v1583
    %v1585 = vsel %vm1445, %v1570, %v1584
    %v1586 = vsel %vm1447, %v1571, %v1585
    %v1587 = vsel %vm1449, %v1572, %v1586
    %v1588 = vsel %vm1437, %v1574, %v1573
    %v1589 = vsel %vm1439, %v1575, %v1588
    %v1590 = vsel %vm1441, %v1576, %v1589
    %v1591 = vsel %vm1443, %v1577, %v1590
    %v1592 = vsel %vm1445, %v1578, %v1591
    %v1593 = vsel %vm1447, %v1579, %v1592
    %v1594 = vsel %vm1449, %v1580, %v1593
    %v1595 = vpack.c.b16 %v1594, %v1587
    %v1613 = vunpack.c.l.b16 %v1357
    %v1614 = vunpack.c.l.b16 %v1358
    %v1615 = vunpack.c.l.b16 %v1359
    %v1616 = vunpack.c.l.b16 %v1360
    %v1617 = vunpack.c.l.b16 %v1361
    %v1618 = vunpack.c.l.b16 %v1362
    %v1619 = vunpack.c.l.b16 %v1363
    %v1620 = vunpack.c.l.b16 %v1364
    %v1621 = vunpack.c.l.b16 %v1365
    %v1622 = vunpack.c.l.b16 %v1366
    %v1623 = vunpack.c.l.b16 %v1367
    %v1624 = vunpack.c.l.b16 %v1368
    %v1625 = vunpack.c.l.b16 %v1369
    %v1626 = vunpack.c.l.b16 %v1370
    %v1627 = vunpack.c.l.b16 %v1371
    %v1628 = vunpack.c.l.b16 %v1372
    %v1629 = vpack.c.b16 %v1614, %v1613
    %v1630 = vpack.c.b16 %v1616, %v1615
    %v1631 = vpack.c.b16 %v1618, %v1617
    %v1632 = vpack.c.b16 %v1620, %v1619
    %v1633 = vpack.c.b16 %v1622, %v1621
    %v1634 = vpack.c.b16 %v1624, %v1623
    %v1635 = vpack.c.b16 %v1626, %v1625
    %v1636 = vpack.c.b16 %v1628, %v1627
    %1645 = vmatprep.subr.bf16.mxu0 0
    %1646 = vmatpush1.bf16.msra.mxu0 %v1629
    %1647 = vmatprep.subr.bf16.mxu0 0
    %1648 = vmatpush1.bf16.msra.mxu0 %v1630
    %1649 = vmatprep.subr.bf16.mxu0 0
    %1650 = vmatpush1.bf16.msra.mxu0 %v1631
    %1651 = vmatprep.subr.bf16.mxu0 0
    %1652 = vmatpush1.bf16.msra.mxu0 %v1632
    %1653 = vmatprep.subr.bf16.mxu0 0
    %1654 = vmatpush1.bf16.msra.mxu0 %v1633
    %1655 = vmatprep.subr.bf16.mxu0 0
    %1656 = vmatpush1.bf16.msra.mxu0 %v1634
    %1657 = vmatprep.subr.bf16.mxu0 0
    %1658 = vmatpush1.bf16.msra.mxu0 %v1635
    %1659 = vmatprep.subr.bf16.mxu0 0
    %1660 = vmatpush1.bf16.msra.mxu0 %v1636
    %1661 = vmatprep.subr.bf16.mxu0 0
    %1662 = vmatpush1.bf16.msra.mxu0 0
    %1663 = vmatprep.subr.bf16.mxu0 0
    %1664 = vmatpush1.bf16.msra.mxu0 0
    %1665 = vmatprep.subr.bf16.mxu0 0
    %1666 = vmatpush1.bf16.msra.mxu0 0
    %1667 = vmatprep.subr.bf16.mxu0 0
    %1668 = vmatpush1.bf16.msra.mxu0 0
    %1669 = vmatprep.subr.bf16.mxu0 0
    %1670 = vmatpush1.bf16.msra.mxu0 0
    %1671 = vmatprep.subr.bf16.mxu0 0
    %1672 = vmatpush1.bf16.msra.mxu0 0
    %1673 = vmatprep.subr.bf16.mxu0 0
    %1674 = vmatpush1.bf16.msra.mxu0 0
    %1675 = vmatprep.subr.bf16.mxu0 0
    %1676 = vmatpush1.bf16.msra.mxu0 0
    %1677 = vmatprep.mubr.bf16.mxu0 0
    %1678 = vmatmul.mubr.bf16.gmra.mrb[0].mxu0 %v1595
    %v1679 = vpop.f32.mrb[0].mxu0
    %v1680 = vadd.f32 %v1543, %v1679
    %v1681 = vpop.f32.mrb[0].mxu0
    %v1682 = vpop.f32.mrb[0].mxu0
    %v1683 = vadd.f32 %v1546, %v1682
    %v1684 = vpop.f32.mrb[0].mxu0
    %1685 = vdwg.mxu0
    %v1686 = vld [vmem:[%s10] sm:$0x1]
    %v1688 = vlaneseq
    %v1689 = vshrl.u32 %v1688, 7
    %v1690 = vsub.s32 0, %v1689
    %v1691 = vrot.slane %v1686, %v1690
    %v1693 = vadd.f32 %v1680, %v1691
    %v1694 = vadd.f32 %v1683, %v1691
    %v1695 = vmax.f32 %v1693, 0.0
    %v1696 = vmax.f32 %v1694, 0.0
    %v1697 = vpack.c.bf16 %v1696, %v1695
    %v1698 = vld [vmem:[#allocation14] sm:$0xf]
    %v1699 = vld [vmem:[#allocation14 + $0x4] sm:$0xf]
    %v1700 = vld [vmem:[#allocation14 + $0x8] sm:$0xf]
    %v1701 = vld [vmem:[#allocation14 + $0xc] sm:$0xf]
    %v1702 = vld [vmem:[#allocation14 + $0x10] sm:$0xf]
    %v1703 = vld [vmem:[#allocation14 + $0x14] sm:$0xf]
    %v1704 = vld [vmem:[#allocation14 + $0x18] sm:$0xf]
    %v1705 = vld [vmem:[#allocation14 + $0x1c] sm:$0xf]
    %v1706 = vld [vmem:[#allocation14 + $0x20] sm:$0xf]
    %v1707 = vld [vmem:[#allocation14 + $0x24] sm:$0xf]
    %v1708 = vld [vmem:[#allocation14 + $0x28] sm:$0xf]
    %v1709 = vld [vmem:[#allocation14 + $0x2c] sm:$0xf]
    %v1710 = vld [vmem:[#allocation14 + $0x30] sm:$0xf]
    %v1711 = vld [vmem:[#allocation14 + $0x34] sm:$0xf]
    %v1712 = vld [vmem:[#allocation14 + $0x38] sm:$0xf]
    %v1713 = vld [vmem:[#allocation14 + $0x3c] sm:$0xf]
    %v1714 = vld [vmem:[%s12] sm:$0x1]
    %v1716 = vlaneseq
    %v1717 = vshrl.u32 %v1716, 7
    %v1718 = vsub.s32 0, %v1717
    %v1719 = vrot.slane %v1714, %v1718
    %v1737 = vunpack.c.l.b16 %v1698
    %v1738 = vunpack.c.l.b16 %v1699
    %v1739 = vunpack.c.l.b16 %v1700
    %v1740 = vunpack.c.l.b16 %v1701
    %v1741 = vunpack.c.l.b16 %v1702
    %v1742 = vunpack.c.l.b16 %v1703
    %v1743 = vunpack.c.l.b16 %v1704
    %v1744 = vunpack.c.l.b16 %v1705
    %v1745 = vunpack.c.l.b16 %v1706
    %v1746 = vunpack.c.l.b16 %v1707
    %v1747 = vunpack.c.l.b16 %v1708
    %v1748 = vunpack.c.l.b16 %v1709
    %v1749 = vunpack.c.l.b16 %v1710
    %v1750 = vunpack.c.l.b16 %v1711
    %v1751 = vunpack.c.l.b16 %v1712
    %v1752 = vunpack.c.l.b16 %v1713
    %v1753 = vpack.c.b16 %v1738, %v1737
    %v1754 = vpack.c.b16 %v1740, %v1739
    %v1755 = vpack.c.b16 %v1742, %v1741
    %v1756 = vpack.c.b16 %v1744, %v1743
    %v1757 = vpack.c.b16 %v1746, %v1745
    %v1758 = vpack.c.b16 %v1748, %v1747
    %v1759 = vpack.c.b16 %v1750, %v1749
    %v1760 = vpack.c.b16 %v1752, %v1751
    %1769 = vmatprep.subr.bf16.mxu0 0
    %1770 = vmatpush1.bf16.msra.mxu0 %v1753
    %1771 = vmatprep.subr.bf16.mxu0 0
    %1772 = vmatpush1.bf16.msra.mxu0 %v1754
    %1773 = vmatprep.subr.bf16.mxu0 0
    %1774 = vmatpush1.bf16.msra.mxu0 %v1755
    %1775 = vmatprep.subr.bf16.mxu0 0
    %1776 = vmatpush1.bf16.msra.mxu0 %v1756
    %1777 = vmatprep.subr.bf16.mxu0 0
    %1778 = vmatpush1.bf16.msra.mxu0 %v1757
    %1779 = vmatprep.subr.bf16.mxu0 0
    %1780 = vmatpush1.bf16.msra.mxu0 %v1758
    %1781 = vmatprep.subr.bf16.mxu0 0
    %1782 = vmatpush1.bf16.msra.mxu0 %v1759
    %1783 = vmatprep.subr.bf16.mxu0 0
    %1784 = vmatpush1.bf16.msra.mxu0 %v1760
    %1785 = vmatprep.subr.bf16.mxu0 0
    %1786 = vmatpush1.bf16.msra.mxu0 0
    %1787 = vmatprep.subr.bf16.mxu0 0
    %1788 = vmatpush1.bf16.msra.mxu0 0
    %1789 = vmatprep.subr.bf16.mxu0 0
    %1790 = vmatpush1.bf16.msra.mxu0 0
    %1791 = vmatprep.subr.bf16.mxu0 0
    %1792 = vmatpush1.bf16.msra.mxu0 0
    %1793 = vmatprep.subr.bf16.mxu0 0
    %1794 = vmatpush1.bf16.msra.mxu0 0
    %1795 = vmatprep.subr.bf16.mxu0 0
    %1796 = vmatpush1.bf16.msra.mxu0 0
    %1797 = vmatprep.subr.bf16.mxu0 0
    %1798 = vmatpush1.bf16.msra.mxu0 0
    %1799 = vmatprep.subr.bf16.mxu0 0
    %1800 = vmatpush1.bf16.msra.mxu0 0
    %1801 = vmatprep.mubr.bf16.mxu0 0
    %1802 = vmatmul.mubr.bf16.gmra.mrb[0].mxu0 %v1697
    %v1803 = vpop.f32.mrb[0].mxu0
    %v1804 = vadd.f32 %v1719, %v1803
    %v1805 = vpop.f32.mrb[0].mxu0
    %v1806 = vpop.f32.mrb[0].mxu0
    %v1807 = vadd.f32 %v1719, %v1806
    %v1808 = vpop.f32.mrb[0].mxu0
    %1809 = vdwg.mxu0
    %v1810 = vmax.f32 %v1804, 0.0
    %v1811 = vmax.f32 %v1807, 0.0
    %v1812 = vpack.c.bf16 %v1811, %v1810
    %v1813 = vld [vmem:[#allocation16] sm:$0xf]
    %v1814 = vld [vmem:[#allocation16 + $0x4] sm:$0xf]
    %v1815 = vld [vmem:[#allocation16 + $0x8] sm:$0xf]
    %v1816 = vld [vmem:[#allocation16 + $0xc] sm:$0xf]
    %v1817 = vld [vmem:[#allocation16 + $0x10] sm:$0xf]
    %v1818 = vld [vmem:[#allocation16 + $0x14] sm:$0xf]
    %v1819 = vld [vmem:[#allocation16 + $0x18] sm:$0xf]
    %v1820 = vld [vmem:[#allocation16 + $0x1c] sm:$0xf]
    %v1821 = vld [vmem:[#allocation16 + $0x20] sm:$0xf]
    %v1822 = vld [vmem:[#allocation16 + $0x24] sm:$0xf]
    %v1823 = vld [vmem:[#allocation16 + $0x28] sm:$0xf]
    %v1824 = vld [vmem:[#allocation16 + $0x2c] sm:$0xf]
    %v1825 = vld [vmem:[#allocation16 + $0x30] sm:$0xf]
    %v1826 = vld [vmem:[#allocation16 + $0x34] sm:$0xf]
    %v1827 = vld [vmem:[#allocation16 + $0x38] sm:$0xf]
    %v1828 = vld [vmem:[#allocation16 + $0x3c] sm:$0xf]
    %v1829 = vld [vmem:[%s14] sm:$0x1]
    %v1831 = vlaneseq
    %v1832 = vshrl.u32 %v1831, 7
    %v1833 = vsub.s32 0, %v1832
    %v1834 = vrot.slane %v1829, %v1833
    %v1852 = vunpack.c.l.b16 %v1813
    %v1853 = vunpack.c.l.b16 %v1814
    %v1854 = vunpack.c.l.b16 %v1815
    %v1855 = vunpack.c.l.b16 %v1816
    %v1856 = vunpack.c.l.b16 %v1817
    %v1857 = vunpack.c.l.b16 %v1818
    %v1858 = vunpack.c.l.b16 %v1819
    %v1859 = vunpack.c.l.b16 %v1820
    %v1860 = vunpack.c.l.b16 %v1821
    %v1861 = vunpack.c.l.b16 %v1822
    %v1862 = vunpack.c.l.b16 %v1823
    %v1863 = vunpack.c.l.b16 %v1824
    %v1864 = vunpack.c.l.b16 %v1825
    %v1865 = vunpack.c.l.b16 %v1826
    %v1866 = vunpack.c.l.b16 %v1827
    %v1867 = vunpack.c.l.b16 %v1828
    %v1868 = vpack.c.b16 %v1853, %v1852
    %v1869 = vpack.c.b16 %v1855, %v1854
    %v1870 = vpack.c.b16 %v1857, %v1856
    %v1871 = vpack.c.b16 %v1859, %v1858
    %v1872 = vpack.c.b16 %v1861, %v1860
    %v1873 = vpack.c.b16 %v1863, %v1862
    %v1874 = vpack.c.b16 %v1865, %v1864
    %v1875 = vpack.c.b16 %v1867, %v1866
    %1884 = vmatprep.subr.bf16.mxu0 0
    %1885 = vmatpush1.bf16.msra.mxu0 %v1868
    %1886 = vmatprep.subr.bf16.mxu0 0
    %1887 = vmatpush1.bf16.msra.mxu0 %v1869
    %1888 = vmatprep.subr.bf16.mxu0 0
    %1889 = vmatpush1.bf16.msra.mxu0 %v1870
    %1890 = vmatprep.subr.bf16.mxu0 0
    %1891 = vmatpush1.bf16.msra.mxu0 %v1871
    %1892 = vmatprep.subr.bf16.mxu0 0
    %1893 = vmatpush1.bf16.msra.mxu0 %v1872
    %1894 = vmatprep.subr.bf16.mxu0 0
    %1895 = vmatpush1.bf16.msra.mxu0 %v1873
    %1896 = vmatprep.subr.bf16.mxu0 0
    %1897 = vmatpush1.bf16.msra.mxu0 %v1874
    %1898 = vmatprep.subr.bf16.mxu0 0
    %1899 = vmatpush1.bf16.msra.mxu0 %v1875
    %1900 = vmatprep.subr.bf16.mxu0 0
    %1901 = vmatpush1.bf16.msra.mxu0 0
    %1902 = vmatprep.subr.bf16.mxu0 0
    %1903 = vmatpush1.bf16.msra.mxu0 0
    %1904 = vmatprep.subr.bf16.mxu0 0
    %1905 = vmatpush1.bf16.msra.mxu0 0
    %1906 = vmatprep.subr.bf16.mxu0 0
    %1907 = vmatpush1.bf16.msra.mxu0 0
    %1908 = vmatprep.subr.bf16.mxu0 0
    %1909 = vmatpush1.bf16.msra.mxu0 0
    %1910 = vmatprep.subr.bf16.mxu0 0
    %1911 = vmatpush1.bf16.msra.mxu0 0
    %1912 = vmatprep.subr.bf16.mxu0 0
    %1913 = vmatpush1.bf16.msra.mxu0 0
    %1914 = vmatprep.subr.bf16.mxu0 0
    %1915 = vmatpush1.bf16.msra.mxu0 0
    %1916 = vmatprep.mubr.bf16.mxu0 0
    %1917 = vmatmul.mubr.bf16.gmra.mrb[0].mxu0 %v1812
    %v1918 = vpop.f32.mrb[0].mxu0
    %v1919 = vadd.f32 %v1834, %v1918
    %v1920 = vpop.f32.mrb[0].mxu0
    %v1921 = vpop.f32.mrb[0].mxu0
    %v1922 = vadd.f32 %v1834, %v1921
    %v1923 = vpop.f32.mrb[0].mxu0
    %1924 = vdwg.mxu0
    %v1925 = vld [vmem:[#allocation5] sm:$0xff]
    %v1926 = vld [vmem:[#allocation5 + $0x8] sm:$0xff]
    %v1927 = vadd.f32 %v1925, %v1919
    %v1928 = vadd.f32 %v1926, %v1922
    %1929 = vadd.xlane.f32.xlu0 %v1927
    %v1930 = vpop.xlane.xlu0 %1929
    %1931 = vadd.xlane.f32.xlu0 %v1928
    %v1932 = vpop.xlane.xlu0 %1931
    %v1933 = vmul.f32 %v1930, 0.03125
    %v1934 = vmul.f32 %v1932, 0.03125
    %v1935 = vlaneseq
    %v1936 = vand.u32 %v1935, 127
    %vm1937 = vcmp.lt.s32.totalorder %v1936, 32
    %v1938 = vsub.f32 %v1927, %v1933
    %v1939 = vsub.f32 %v1928, %v1934
    %v1940 = vmul.f32 %v1938, %v1938
    %v1941 = vmul.f32 %v1939, %v1939
    %v1942 = vsel %vm1937, 1, 0
    %vm1943 = vcmp.eq.s32.totalorder %v1942, 1
    %v1944 = vsel %vm1943, %v1940, 0.0
    %v1945 = vsel %vm1943, %v1941, 0.0
    %1946 = vadd.xlane.f32.xlu0 %v1944
    %v1947 = vpop.xlane.xlu0 %1946
    %1948 = vadd.xlane.f32.xlu0 %v1945
    %v1949 = vpop.xlane.xlu0 %1948
    %v1950 = vmul.f32 %v1947, 0.03125
    %v1951 = vmul.f32 %v1949, 0.03125
    %v1952 = vadd.f32 %v1950, 1e-05
    %v1953 = vadd.f32 %v1951, 1e-05
    %v1954 = vrsqrt.pop %v1952
    %v1955 = vrsqrt.pop %v1953
    %v1956 = vmul.f32 %v1938, %v1954
    %v1957 = vmul.f32 %v1939, %v1955
    %v1958 = vld [vmem:[%s15] sm:$0x1]
    %v1960 = vlaneseq
    %v1961 = vshrl.u32 %v1960, 7
    %v1962 = vsub.s32 0, %v1961
    %v1963 = vrot.slane %v1958, %v1962
    %v1965 = vmul.f32 %v1956, %v1963
    %v1966 = vmul.f32 %v1957, %v1963
    %v1967 = vld [vmem:[%s16] sm:$0x1]
    %v1969 = vlaneseq
    %v1970 = vshrl.u32 %v1969, 7
    %v1971 = vsub.s32 0, %v1970
    %v1972 = vrot.slane %v1967, %v1971
    %v1974 = vadd.f32 %v1965, %v1972
    %v1975 = vadd.f32 %v1966, %v1972
    %1976 = vst [vmem:[#allocation17] sm:$0xff] %v1974
    %1977 = vst [vmem:[#allocation17 + $0x8] sm:$0xff] %v1975
    // Predicated region
    $region106: #{tpu_custom_call.1} parent=1 // pred_check
      _
    $region107: #{tpu_custom_call.1} parent=1 // pred_check_branch
      %1979 = sbr.rel (0) target = $region109
    $region108: #{tpu_custom_call.1} parent=1 // pred_region
      %s1981 = ssub.s32 256, 256
      %1982 = vsyncadd [#allocation4], %s1981
      %s1983 = sshll.u32 [#allocation17], 4
      %s1984 = int_to_ptr.vmem [resolvable:$true] %s1983
      %1989 = dma.vmem_to_hbm [thread:$0]  %s1984, 256, %s17, [#allocation4], 128, 128, 8
    $region109: #{tpu_custom_call.1} parent=1 // pred_fallthru
      _
    // Predicated region
    $region110: #{tpu_custom_call.1} parent=1 // pred_check
      _
    $region111: #{tpu_custom_call.1} parent=1 // pred_check_branch
      %1991 = sbr.rel (0) target = $region113
    $region112: #{tpu_custom_call.1} parent=1 // pred_region
      %1992 = dma.done [#allocation4], 256
    $region113: #{tpu_custom_call.1} parent=1 // pred_fallthru
      _
    %1993 = vsyncpa [#allocation3], 1
    %1994 = vsyncpa [#allocation6], 1
    %1995 = vsyncpa [#allocation9], 1
    %1996 = vsyncpa [#allocation12], 1
    %1997 = vsyncpa [#allocation15], 1
    %1998 = vsyncpa [#allocation4], 1

</llo_original>
